<compile_context>
chip_gen: v7x
topology: tpu7x:2x2x1
jax: 0.10.0
libtpu: 0.0.40
codegen_flags: <defaults>
</compile_context>

<pallas_src>
import numpy as np
import jax
import jax.numpy as jnp
from jax.experimental import pallas as pl
from jax.experimental.pallas import tpu as pltpu

# ---- config (DiTBlock(c_s, c_z, inf, eps)) ----
C_S = 32
C_Z = 16
N_HEADS = 4
HEAD_DIM = C_S // N_HEADS
INF = 1e9
EPS = 1e-5
HIDDEN = 2 * C_S  # transition expansion factor n=2


def _ln(x, eps):
    mu = jnp.mean(x, axis=-1, keepdims=True)
    var = jnp.mean((x - mu) ** 2, axis=-1, keepdims=True)
    return (x - mu) * jax.lax.rsqrt(var + eps)


# ----------------------------- Pallas kernel -----------------------------
def dit_block_kernel(bs_ref, t_ref, zf_ref, mb_ref,
                     Wcond_ref, Wqkvg_ref, bias_ref, Wo_ref,
                     S_ref, ST_ref, Ball_ref, VM_ref, GS_ref,
                     W12_ref, W3_ref, out_ref):
    f32 = jnp.float32
    TB, N, _ = bs_ref.shape
    R = TB * N                     # rows processed per grid step
    NHN = N_HEADS * N

    bs = bs_ref[...].reshape(R, C_S)
    t = t_ref[...].reshape(R, C_S)
    zf = zf_ref[...].reshape(R, N * C_Z)   # lane-dense pair features
    mb = mb_ref[...]                       # (TB, N, N) precombined mask/beta bias

    # ---- fused conditioning: one LayerNorm(t), one (32,192) matmul over TB*N rows ----
    ln_t = _ln(t, EPS)
    cond = jnp.dot(ln_t, Wcond_ref[...], preferred_element_type=f32) + bias_ref[0]
    sc1 = jax.nn.sigmoid(cond[:, 0 * C_S:1 * C_S])
    sh1 = cond[:, 1 * C_S:2 * C_S]
    og1 = jax.nn.sigmoid(cond[:, 2 * C_S:3 * C_S])   # -2 gate bias folded into bias slab
    sc2 = jax.nn.sigmoid(cond[:, 3 * C_S:4 * C_S])
    sh2 = cond[:, 4 * C_S:5 * C_S]
    og2 = jax.nn.sigmoid(cond[:, 5 * C_S:6 * C_S])   # -2 gate bias folded into bias slab

    # ---------------- DiTAttention ----------------
    a = sc1 * _ln(bs, EPS) + sh1                     # AdaLN(bs | t)

    # fused Q|K|V|Gate projection (1/sqrt(d) pre-folded into the Q columns)
    qkvg = jnp.dot(a, Wqkvg_ref[...], preferred_element_type=f32) + bias_ref[1, :4 * C_S]
    q = qkvg[:, 0 * C_S:1 * C_S]
    k = qkvg[:, 1 * C_S:2 * C_S]
    v = qkvg[:, 2 * C_S:3 * C_S]
    gate = jax.nn.sigmoid(qkvg[:, 3 * C_S:4 * C_S])

    # ---- pair bias: stacked group-sum stats, all heads at once, out of the loop ----
    zf2 = jnp.concatenate([zf, zf * zf], axis=0)                          # (2R, N*C_Z)
    stats = jnp.dot(zf2, S_ref[...], preferred_element_type=f32)          # (2R, N)
    mu = stats[:R] * (1.0 / C_Z)
    # one-pass variance, clamped >=0 to guard cancellation for large-mean z
    var = jnp.maximum(stats[R:] * (1.0 / C_Z) - mu * mu, 0.0)
    inv_std = jax.lax.rsqrt(var + EPS)
    stacked = jnp.concatenate([mu, inv_std], axis=0)                      # (2R, N)
    bcast = jnp.dot(stacked, ST_ref[...], preferred_element_type=f32)     # (2R, N*C_Z)
    zn = (zf - bcast[:R]) * bcast[R:]                                     # LayerNorm(z)
    zw = jnp.dot(zn, Ball_ref[...], preferred_element_type=f32)           # (R, NH*N)
    # NOTE: the bz term of LayerNorm(z) is constant across keys -> softmax-invariant,
    #       intentionally dropped (only valid because scores feed a softmax).

    VMASK = VM_ref[...]   # (NH*N, C_S) block-diagonal head mask
    GSUM = GS_ref[...]    # (NH*N, NH*N) per-head-block ones (softmax denom broadcast)

    outs = []
    for b in range(TB):                          # static unroll over batch elems in tile
        r0 = b * N
        q_b = q[r0:r0 + N]
        k_b = k[r0:r0 + N]
        v_b = v[r0:r0 + N]
        # block-diagonal fused heads: 2 matmuls instead of 8 tiny per-head ones
        kbig = jnp.concatenate([k_b] * N_HEADS, axis=0) * VMASK           # (NH*N, C_S)
        vbig = jnp.concatenate([v_b] * N_HEADS, axis=0) * VMASK           # (NH*N, C_S)
        bias_all = zw[r0:r0 + N] + jnp.concatenate([mb[b]] * N_HEADS, axis=1)
        scores = jax.lax.dot_general(q_b, kbig, (((1,), (1,)), ((), ())),
                                     preferred_element_type=f32) + bias_all   # (N, NH*N)
        # global row max (>= every per-head max; softmax is shift-invariant per block)
        e = jnp.exp(scores - jnp.max(scores, axis=-1, keepdims=True))
        denom = jnp.dot(e, GSUM, preferred_element_type=f32)              # per-block sums
        p = e * pl.reciprocal(denom, approx=True)
        outs.append(jnp.dot(p, vbig, preferred_element_type=f32))         # (N, C_S)
    o_cat = outs[0] if TB == 1 else jnp.concatenate(outs, axis=0)         # (R, C_S)

    attn_out = jnp.dot(o_cat * gate, Wo_ref[...], preferred_element_type=f32)
    bs1 = bs + og1 * attn_out                        # first residual

    # ---------------- DiTTransition (AdaLN + SwiGLU + gated output) ----------------
    a2 = sc2 * _ln(bs1, EPS) + sh2
    uv = jnp.dot(a2, W12_ref[...], preferred_element_type=f32)            # (R, 2*HIDDEN)
    u = uv[:, :HIDDEN]
    v2 = uv[:, HIDDEN:]
    hidden = (u * jax.nn.sigmoid(u)) * v2            # SwiGLU
    trans = jnp.dot(hidden, W3_ref[...], preferred_element_type=f32)
    out_ref[...] = (bs1 + og2 * trans).reshape(TB, N, C_S)                # second residual


# ----------------------------- wrapper -----------------------------
def _const_spec(w):
    nd = w.ndim
    return pl.BlockSpec(w.shape, lambda i, _nd=nd: (0,) * _nd)


def _fold_weights(p, N):
    """Fold gains/biases/scales into weights and pack into lane-friendly buffers (f32)."""
    f32 = jnp.float32
    g1 = p["g_ada1"][0]                  # (C_S,)
    g2 = p["g_ada2"][0]
    # fused conditioning projection (AdaLN gains folded into each weight)
    W_cond = jnp.concatenate([
        g1[:, None] * p["Wsc1"], g1[:, None] * p["Wsh1"], g1[:, None] * p["Wog1"],
        g2[:, None] * p["Wsc2"], g2[:, None] * p["Wsh2"], g2[:, None] * p["Wog2"],
    ], axis=1)                                                     # (C_S, 6*C_S)

    def heads_to_cols(W):                # (NH, C_S, D) -> (C_S, NH*D)
        return jnp.transpose(W, (1, 0, 2)).reshape(C_S, N_HEADS * HEAD_DIM)

    scale = 1.0 / float(np.sqrt(HEAD_DIM))
    W_qkvg = jnp.concatenate([heads_to_cols(p["Wq"]) * scale, heads_to_cols(p["Wk"]),
                              heads_to_cols(p["Wv"]), heads_to_cols(p["Wg"])],
                             axis=1)                               # (C_S, 4*C_S)

    zeros = jnp.zeros((C_S,), f32)
    b_cond = jnp.concatenate([zeros, zeros, p["bog1"][0], zeros, zeros, p["bog2"][0]])
    b_qkvg = jnp.concatenate([p["bq"].reshape(-1) * scale, jnp.zeros((5 * C_S,), f32)])
    bias2 = jnp.stack([b_cond, b_qkvg])                            # (2, 6*C_S) packed biases

    Wo_stacked = p["Wo"].reshape(N_HEADS * HEAD_DIM, C_S)          # (C_S, C_S)

    # pair-bias helpers for the lane-dense z layout
    eye_n = jnp.eye(N, dtype=f32)
    S = jnp.kron(eye_n, jnp.ones((C_Z, 1), f32))                   # (N*C_Z, N) group-sum
    ST = S.T                                                       # (N, N*C_Z) broadcast-back
    wfold = p["gz"][0][:, None] * p["Wb"].T                        # (C_Z, NH)  gz folded
    B_all = (eye_n[:, None, None, :] * wfold[None, :, :, None]
             ).reshape(N * C_Z, N_HEADS * N)                       # block-diag pair-bias weights

    # block-diagonal head masks for the fused score / PV matmuls
    VMASK = jnp.kron(jnp.eye(N_HEADS, dtype=f32), jnp.ones((N, HEAD_DIM), f32))  # (NH*N, C_S)
    GSUM = jnp.kron(jnp.eye(N_HEADS, dtype=f32), jnp.ones((N, N), f32))          # (NH*N, NH*N)

    W12 = jnp.concatenate([p["W1"], p["W2"]], axis=1)              # (C_S, 2*HIDDEN)
    W3 = p["W3"]                                                   # (HIDDEN, C_S)
    return [W_cond, W_qkvg, bias2, Wo_stacked, S, ST, B_all, VMASK, GSUM, W12, W3]


def dit_block_pallas(bs, z, t, z_mask, beta, params, tb=None):
    B, N, _ = bs.shape
    # precombine mask + beta into one additive bias (one DMA stream; no zeros array)
    mask_bias = (z_mask.astype(jnp.float32) - 1.0) * INF
    if beta is not None:
        mask_bias = mask_bias + beta.astype(jnp.float32)
    zf = z.reshape(B, N, N * C_Z)        # lane-dense pair features (minor dim N*C_Z)

    if tb is None:
        tb = max(1, B // 2)              # keep >= 2 grid steps when B >= 2 (v7x: 2 TCs)
    steps = pl.cdiv(B, tb)
    Bp = steps * tb
    if Bp != B:                          # pad batch to a multiple of the batch tile
        padfn = lambda x: jnp.pad(x, ((0, Bp - B),) + ((0, 0),) * (x.ndim - 1))
        bs_in, t_in, zf_in, mb_in = padfn(bs), padfn(t), padfn(zf), padfn(mask_bias)
    else:
        bs_in, t_in, zf_in, mb_in = bs, t, zf, mask_bias

    weights = _fold_weights(params, N)

    data_specs = [
        pl.BlockSpec((tb, N, C_S), lambda i: (i, 0, 0)),           # bs
        pl.BlockSpec((tb, N, C_S), lambda i: (i, 0, 0)),           # t
        pl.BlockSpec((tb, N, N * C_Z), lambda i: (i, 0, 0)),       # zf
        pl.BlockSpec((tb, N, N), lambda i: (i, 0, 0)),             # mask/beta bias
    ]
    weight_specs = [_const_spec(w) for w in weights]

    out = pl.pallas_call(
        dit_block_kernel,
        out_shape=jax.ShapeDtypeStruct((Bp, N, C_S), jnp.float32),
        grid=(steps,),
        in_specs=data_specs + weight_specs,
        out_specs=pl.BlockSpec((tb, N, C_S), lambda i: (i, 0, 0)),
        compiler_params=pltpu.CompilerParams(
            dimension_semantics=("parallel",),
            vmem_limit_bytes=32 * 1024 * 1024),
    )(bs_in, t_in, zf_in, mb_in, *weights)
    return out[:B] if Bp != B else out


# ----------------------------- params & reference -----------------------------
def init_params(key):
    keys = iter(jax.random.split(key, 32))

    def lin(shape, fan_in):
        return (jax.random.normal(next(keys), shape, jnp.float32)
                / np.sqrt(fan_in)).astype(jnp.float32)

    p = {}
    p["g_ada1"] = jnp.ones((1, C_S), jnp.float32)
    p["Wsc1"] = lin((C_S, C_S), C_S)
    p["Wsh1"] = lin((C_S, C_S), C_S)
    p["Wq"] = lin((N_HEADS, C_S, HEAD_DIM), C_S)
    p["bq"] = jnp.zeros((N_HEADS, HEAD_DIM), jnp.float32)
    p["Wk"] = lin((N_HEADS, C_S, HEAD_DIM), C_S)
    p["Wv"] = lin((N_HEADS, C_S, HEAD_DIM), C_S)
    p["Wg"] = lin((N_HEADS, C_S, HEAD_DIM), C_S)
    p["gz"] = jnp.ones((1, C_Z), jnp.float32)
    p["bz"] = jnp.zeros((1, C_Z), jnp.float32)
    p["Wb"] = lin((N_HEADS, C_Z), C_Z)
    p["Wo"] = lin((N_HEADS, HEAD_DIM, C_S), C_S)
    p["Wog1"] = lin((C_S, C_S), C_S)
    p["bog1"] = jnp.full((1, C_S), -2.0, jnp.float32)
    p["g_ada2"] = jnp.ones((1, C_S), jnp.float32)
    p["Wsc2"] = lin((C_S, C_S), C_S)
    p["Wsh2"] = lin((C_S, C_S), C_S)
    p["W1"] = lin((C_S, HIDDEN), C_S)
    p["W2"] = lin((C_S, HIDDEN), C_S)
    p["W3"] = lin((HIDDEN, C_S), HIDDEN)
    p["Wog2"] = lin((C_S, C_S), C_S)
    p["bog2"] = jnp.full((1, C_S), -2.0, jnp.float32)
    return p


def dit_block_ref(bs, z, t, z_mask, beta, p):
    if beta is None:
        beta = jnp.zeros(z_mask.shape, bs.dtype)
    s_ln = _ln(t, EPS) * p["g_ada1"][0]
    a_ln = _ln(bs, EPS)
    a = jax.nn.sigmoid(s_ln @ p["Wsc1"]) * a_ln + s_ln @ p["Wsh1"]
    z_ln = _ln(z, EPS) * p["gz"][0] + p["bz"][0]
    mask_bias = (z_mask - 1.0) * INF + beta
    scale = 1.0 / np.sqrt(HEAD_DIM)
    attn_out = jnp.zeros_like(bs)
    for h in range(N_HEADS):
        qh = a @ p["Wq"][h] + p["bq"][h]
        kh = a @ p["Wk"][h]
        vh = a @ p["Wv"][h]
        gh = jax.nn.sigmoid(a @ p["Wg"][h])
        bias_h = jnp.sum(z_ln * p["Wb"][h], axis=-1)
        scores = jnp.einsum("bnd,bmd->bnm", qh, kh) * scale + bias_h + mask_bias
        scores = scores - jnp.max(scores, axis=-1, keepdims=True)
        pr = jnp.exp(scores)
        pr = pr / jnp.sum(pr, axis=-1, keepdims=True)
        oh = jnp.einsum("bnm,bmd->bnd", pr, vh) * gh
        attn_out = attn_out + oh @ p["Wo"][h]
    og1 = jax.nn.sigmoid(s_ln @ p["Wog1"] + p["bog1"][0])
    bs1 = bs + og1 * attn_out

    s_ln2 = _ln(t, EPS) * p["g_ada2"][0]
    a2_ln = _ln(bs1, EPS)
    a2 = jax.nn.sigmoid(s_ln2 @ p["Wsc2"]) * a2_ln + s_ln2 @ p["Wsh2"]
    u = a2 @ p["W1"]
    v2 = a2 @ p["W2"]
    hidden = (u * jax.nn.sigmoid(u)) * v2
    trans = hidden @ p["W3"]
    og2 = jax.nn.sigmoid(s_ln2 @ p["Wog2"] + p["bog2"][0])
    return bs1 + og2 * trans


if __name__ == "__main__":
    key = jax.random.PRNGKey(0)
    kb, kz, kt, km, kbe, kp = jax.random.split(key, 6)
    B, N = 2, 8
    bs = jax.random.normal(kb, (B, N, C_S), jnp.float32)
    z = jax.random.normal(kz, (B, N, N, C_Z), jnp.float32)
    t = jax.random.normal(kt, (B, N, C_S), jnp.float32)
    z_mask = (jax.random.uniform(km, (B, N, N)) > 0.2).astype(jnp.float32)
    z_mask = jnp.maximum(z_mask, jnp.eye(N, dtype=jnp.float32)[None])  # rows never fully masked
    beta = 0.1 * jax.random.normal(kbe, (B, N, N), jnp.float32)
    params = init_params(kp)

    out = dit_block_pallas(bs, z, t, z_mask, beta, params)
    out = jax.block_until_ready(out)

    ref = dit_block_ref(bs, z, t, z_mask, beta, params)
    # slightly relaxed tolerance: approx reciprocal (EUP) in the softmax denominator.
    np.testing.assert_allclose(np.asarray(out), np.asarray(ref), rtol=1e-3, atol=1e-3)
    print("KERNEL_OK")
</pallas_src>

<mosaic_0001>
module attributes {stable_mosaic.version = 11 : i64} {
  func.func @dit_block_kernel(%arg0: i32, %arg1: memref<1x8x32xf32, #tpu.memory_space<vmem>>, %arg2: memref<1x8x32xf32, #tpu.memory_space<vmem>>, %arg3: memref<1x8x128xf32, #tpu.memory_space<vmem>>, %arg4: memref<1x8x8xf32, #tpu.memory_space<vmem>>, %arg5: memref<32x192xf32, #tpu.memory_space<vmem>>, %arg6: memref<32x128xf32, #tpu.memory_space<vmem>>, %arg7: memref<2x192xf32, #tpu.memory_space<vmem>>, %arg8: memref<32x32xf32, #tpu.memory_space<vmem>>, %arg9: memref<128x8xf32, #tpu.memory_space<vmem>>, %arg10: memref<8x128xf32, #tpu.memory_space<vmem>>, %arg11: memref<128x32xf32, #tpu.memory_space<vmem>>, %arg12: memref<32x32xf32, #tpu.memory_space<vmem>>, %arg13: memref<32x32xf32, #tpu.memory_space<vmem>>, %arg14: memref<32x128xf32, #tpu.memory_space<vmem>>, %arg15: memref<64x32xf32, #tpu.memory_space<vmem>>, %arg16: memref<1x8x32xf32, #tpu.memory_space<vmem>>) attributes {dimension_semantics = [#tpu.dimension_semantics<parallel>], iteration_bounds = array<i64: 2>, scalar_prefetch = 0 : i64, scratch_operands = 0 : i64, tpu.core_type = #tpu.core_type<tc>, window_params = [{transform_indices = @transform_0, window_bounds = array<i64: 1, 8, 32>}, {transform_indices = @transform_1, window_bounds = array<i64: 1, 8, 32>}, {transform_indices = @transform_2, window_bounds = array<i64: 1, 8, 128>}, {transform_indices = @transform_3, window_bounds = array<i64: 1, 8, 8>}, {pipeline_mode = #tpu.pipeline_mode<synchronous>, transform_indices = @transform_4, window_bounds = array<i64: 32, 192>}, {pipeline_mode = #tpu.pipeline_mode<synchronous>, transform_indices = @transform_5, window_bounds = array<i64: 32, 128>}, {pipeline_mode = #tpu.pipeline_mode<synchronous>, transform_indices = @transform_6, window_bounds = array<i64: 2, 192>}, {pipeline_mode = #tpu.pipeline_mode<synchronous>, transform_indices = @transform_7, window_bounds = array<i64: 32, 32>}, {pipeline_mode = #tpu.pipeline_mode<synchronous>, transform_indices = @transform_8, window_bounds = array<i64: 128, 8>}, {pipeline_mode = #tpu.pipeline_mode<synchronous>, transform_indices = @transform_9, window_bounds = array<i64: 8, 128>}, {pipeline_mode = #tpu.pipeline_mode<synchronous>, transform_indices = @transform_10, window_bounds = array<i64: 128, 32>}, {pipeline_mode = #tpu.pipeline_mode<synchronous>, transform_indices = @transform_11, window_bounds = array<i64: 32, 32>}, {pipeline_mode = #tpu.pipeline_mode<synchronous>, transform_indices = @transform_12, window_bounds = array<i64: 32, 32>}, {pipeline_mode = #tpu.pipeline_mode<synchronous>, transform_indices = @transform_13, window_bounds = array<i64: 32, 128>}, {pipeline_mode = #tpu.pipeline_mode<synchronous>, transform_indices = @transform_14, window_bounds = array<i64: 64, 32>}, {transform_indices = @transform_15, window_bounds = array<i64: 1, 8, 32>}]} {
    %c0 = arith.constant 0 : index
    %c0_0 = arith.constant 0 : index
    %c0_1 = arith.constant 0 : index
    %0 = vector.load %arg1[%c0, %c0_0, %c0_1] : memref<1x8x32xf32, #tpu.memory_space<vmem>>, vector<1x8x32xf32>
    %1 = vector.shape_cast %0 : vector<1x8x32xf32> to vector<8x32xf32>
    %c0_2 = arith.constant 0 : index
    %c0_3 = arith.constant 0 : index
    %c0_4 = arith.constant 0 : index
    %2 = vector.load %arg2[%c0_2, %c0_3, %c0_4] : memref<1x8x32xf32, #tpu.memory_space<vmem>>, vector<1x8x32xf32>
    %3 = vector.shape_cast %2 : vector<1x8x32xf32> to vector<8x32xf32>
    %c0_5 = arith.constant 0 : index
    %c0_6 = arith.constant 0 : index
    %c0_7 = arith.constant 0 : index
    %4 = vector.load %arg3[%c0_5, %c0_6, %c0_7] : memref<1x8x128xf32, #tpu.memory_space<vmem>>, vector<1x8x128xf32>
    %5 = vector.shape_cast %4 : vector<1x8x128xf32> to vector<8x128xf32>
    %c0_8 = arith.constant 0 : index
    %c0_9 = arith.constant 0 : index
    %c0_10 = arith.constant 0 : index
    %6 = vector.load %arg4[%c0_8, %c0_9, %c0_10] : memref<1x8x8xf32, #tpu.memory_space<vmem>>, vector<1x8x8xf32>
    %cst = arith.constant dense<0.000000e+00> : vector<8xf32>
    %7 = vector.multi_reduction <add>, %3, %cst [1] : vector<8x32xf32> to vector<8xf32>
    %8 = vector.shape_cast %7 : vector<8xf32> to vector<8x1xf32>
    %cst_11 = arith.constant 3.200000e+01 : f32
    %9 = vector.broadcast %cst_11 : f32 to vector<8x1xf32>
    %10 = arith.divf %8, %9 : vector<8x1xf32>
    %11 = vector.broadcast %10 : vector<8x1xf32> to vector<8x32xf32>
    %12 = arith.subf %3, %11 : vector<8x32xf32>
    %13 = arith.mulf %12, %12 : vector<8x32xf32>
    %cst_12 = arith.constant dense<0.000000e+00> : vector<8xf32>
    %14 = vector.multi_reduction <add>, %13, %cst_12 [1] : vector<8x32xf32> to vector<8xf32>
    %15 = vector.shape_cast %14 : vector<8xf32> to vector<8x1xf32>
    %cst_13 = arith.constant 3.200000e+01 : f32
    %16 = vector.broadcast %cst_13 : f32 to vector<8x1xf32>
    %17 = arith.divf %15, %16 : vector<8x1xf32>
    %18 = vector.broadcast %10 : vector<8x1xf32> to vector<8x32xf32>
    %19 = arith.subf %3, %18 : vector<8x32xf32>
    %cst_14 = arith.constant 9.99999974E-6 : f32
    %20 = vector.broadcast %cst_14 : f32 to vector<8x1xf32>
    %21 = arith.addf %17, %20 : vector<8x1xf32>
    %22 = math.rsqrt %21 : vector<8x1xf32>
    %23 = vector.broadcast %22 : vector<8x1xf32> to vector<8x32xf32>
    %24 = arith.mulf %19, %23 : vector<8x32xf32>
    %c0_15 = arith.constant 0 : index
    %c0_16 = arith.constant 0 : index
    %25 = vector.load %arg5[%c0_15, %c0_16] : memref<32x192xf32, #tpu.memory_space<vmem>>, vector<32x192xf32>
    %cst_17 = arith.constant dense<0.000000e+00> : vector<8x192xf32>
    %26 = tpu.matmul %24, %25, %cst_17 {dimension_numbers = #tpu.dot_dimension_numbers<[1], [0], [0], [1], [0, 0, 1, 1], [], []>} : vector<8x32xf32>, vector<32x192xf32>, vector<8x192xf32> -> vector<8x192xf32>
    %c0_18 = arith.constant 0 : index
    %c0_19 = arith.constant 0 : index
    %27 = vector.load %arg7[%c0_18, %c0_19] : memref<2x192xf32, #tpu.memory_space<vmem>>, vector<1x192xf32>
    %28 = vector.shape_cast %27 : vector<1x192xf32> to vector<192xf32>
    %29 = vector.shape_cast %28 : vector<192xf32> to vector<1x192xf32>
    %30 = vector.broadcast %29 : vector<1x192xf32> to vector<8x192xf32>
    %31 = arith.addf %26, %30 : vector<8x192xf32>
    %32 = vector.extract_strided_slice %31 {offsets = [0, 0], sizes = [8, 32], strides = [1, 1]} : vector<8x192xf32> to vector<8x32xf32>
    %33 = arith.negf %32 : vector<8x32xf32>
    %34 = math.exp %33 : vector<8x32xf32>
    %cst_20 = arith.constant 1.000000e+00 : f32
    %35 = vector.broadcast %cst_20 : f32 to vector<8x32xf32>
    %36 = arith.addf %35, %34 : vector<8x32xf32>
    %37 = arith.divf %35, %36 : vector<8x32xf32>
    %38 = vector.extract_strided_slice %31 {offsets = [0, 32], sizes = [8, 32], strides = [1, 1]} : vector<8x192xf32> to vector<8x32xf32>
    %39 = vector.extract_strided_slice %31 {offsets = [0, 64], sizes = [8, 32], strides = [1, 1]} : vector<8x192xf32> to vector<8x32xf32>
    %40 = arith.negf %39 : vector<8x32xf32>
    %41 = math.exp %40 : vector<8x32xf32>
    %cst_21 = arith.constant 1.000000e+00 : f32
    %42 = vector.broadcast %cst_21 : f32 to vector<8x32xf32>
    %43 = arith.addf %42, %41 : vector<8x32xf32>
    %44 = arith.divf %42, %43 : vector<8x32xf32>
    %45 = vector.extract_strided_slice %31 {offsets = [0, 96], sizes = [8, 32], strides = [1, 1]} : vector<8x192xf32> to vector<8x32xf32>
    %46 = arith.negf %45 : vector<8x32xf32>
    %47 = math.exp %46 : vector<8x32xf32>
    %cst_22 = arith.constant 1.000000e+00 : f32
    %48 = vector.broadcast %cst_22 : f32 to vector<8x32xf32>
    %49 = arith.addf %48, %47 : vector<8x32xf32>
    %50 = arith.divf %48, %49 : vector<8x32xf32>
    %51 = vector.extract_strided_slice %31 {offsets = [0, 128], sizes = [8, 32], strides = [1, 1]} : vector<8x192xf32> to vector<8x32xf32>
    %52 = vector.extract_strided_slice %31 {offsets = [0, 160], sizes = [8, 32], strides = [1, 1]} : vector<8x192xf32> to vector<8x32xf32>
    %53 = arith.negf %52 : vector<8x32xf32>
    %54 = math.exp %53 : vector<8x32xf32>
    %cst_23 = arith.constant 1.000000e+00 : f32
    %55 = vector.broadcast %cst_23 : f32 to vector<8x32xf32>
    %56 = arith.addf %55, %54 : vector<8x32xf32>
    %57 = arith.divf %55, %56 : vector<8x32xf32>
    %cst_24 = arith.constant dense<0.000000e+00> : vector<8xf32>
    %58 = vector.multi_reduction <add>, %1, %cst_24 [1] : vector<8x32xf32> to vector<8xf32>
    %59 = vector.shape_cast %58 : vector<8xf32> to vector<8x1xf32>
    %cst_25 = arith.constant 3.200000e+01 : f32
    %60 = vector.broadcast %cst_25 : f32 to vector<8x1xf32>
    %61 = arith.divf %59, %60 : vector<8x1xf32>
    %62 = vector.broadcast %61 : vector<8x1xf32> to vector<8x32xf32>
    %63 = arith.subf %1, %62 : vector<8x32xf32>
    %64 = arith.mulf %63, %63 : vector<8x32xf32>
    %cst_26 = arith.constant dense<0.000000e+00> : vector<8xf32>
    %65 = vector.multi_reduction <add>, %64, %cst_26 [1] : vector<8x32xf32> to vector<8xf32>
    %66 = vector.shape_cast %65 : vector<8xf32> to vector<8x1xf32>
    %cst_27 = arith.constant 3.200000e+01 : f32
    %67 = vector.broadcast %cst_27 : f32 to vector<8x1xf32>
    %68 = arith.divf %66, %67 : vector<8x1xf32>
    %69 = vector.broadcast %61 : vector<8x1xf32> to vector<8x32xf32>
    %70 = arith.subf %1, %69 : vector<8x32xf32>
    %cst_28 = arith.constant 9.99999974E-6 : f32
    %71 = vector.broadcast %cst_28 : f32 to vector<8x1xf32>
    %72 = arith.addf %68, %71 : vector<8x1xf32>
    %73 = math.rsqrt %72 : vector<8x1xf32>
    %74 = vector.broadcast %73 : vector<8x1xf32> to vector<8x32xf32>
    %75 = arith.mulf %70, %74 : vector<8x32xf32>
    %76 = arith.mulf %37, %75 : vector<8x32xf32>
    %77 = arith.addf %76, %38 : vector<8x32xf32>
    %c0_29 = arith.constant 0 : index
    %c0_30 = arith.constant 0 : index
    %78 = vector.load %arg6[%c0_29, %c0_30] : memref<32x128xf32, #tpu.memory_space<vmem>>, vector<32x128xf32>
    %cst_31 = arith.constant dense<0.000000e+00> : vector<8x128xf32>
    %79 = tpu.matmul %77, %78, %cst_31 {dimension_numbers = #tpu.dot_dimension_numbers<[1], [0], [0], [1], [0, 0, 1, 1], [], []>} : vector<8x32xf32>, vector<32x128xf32>, vector<8x128xf32> -> vector<8x128xf32>
    %c1 = arith.constant 1 : index
    %c0_32 = arith.constant 0 : index
    %80 = vector.load %arg7[%c1, %c0_32] : memref<2x192xf32, #tpu.memory_space<vmem>>, vector<1x128xf32>
    %81 = vector.shape_cast %80 : vector<1x128xf32> to vector<128xf32>
    %82 = vector.shape_cast %81 : vector<128xf32> to vector<1x128xf32>
    %83 = vector.broadcast %82 : vector<1x128xf32> to vector<8x128xf32>
    %84 = arith.addf %79, %83 : vector<8x128xf32>
    %85 = vector.extract_strided_slice %84 {offsets = [0, 0], sizes = [8, 32], strides = [1, 1]} : vector<8x128xf32> to vector<8x32xf32>
    %86 = vector.extract_strided_slice %84 {offsets = [0, 32], sizes = [8, 32], strides = [1, 1]} : vector<8x128xf32> to vector<8x32xf32>
    %87 = vector.extract_strided_slice %84 {offsets = [0, 64], sizes = [8, 32], strides = [1, 1]} : vector<8x128xf32> to vector<8x32xf32>
    %88 = vector.extract_strided_slice %84 {offsets = [0, 96], sizes = [8, 32], strides = [1, 1]} : vector<8x128xf32> to vector<8x32xf32>
    %89 = arith.negf %88 : vector<8x32xf32>
    %90 = math.exp %89 : vector<8x32xf32>
    %cst_33 = arith.constant 1.000000e+00 : f32
    %91 = vector.broadcast %cst_33 : f32 to vector<8x32xf32>
    %92 = arith.addf %91, %90 : vector<8x32xf32>
    %93 = arith.divf %91, %92 : vector<8x32xf32>
    %94 = arith.mulf %5, %5 : vector<8x128xf32>
    %95 = tpu.concatenate %5, %94 in 0 : vector<8x128xf32>, vector<8x128xf32> -> vector<16x128xf32>
    %c0_34 = arith.constant 0 : index
    %c0_35 = arith.constant 0 : index
    %96 = vector.load %arg9[%c0_34, %c0_35] : memref<128x8xf32, #tpu.memory_space<vmem>>, vector<128x8xf32>
    %cst_36 = arith.constant dense<0.000000e+00> : vector<16x8xf32>
    %97 = tpu.matmul %95, %96, %cst_36 {dimension_numbers = #tpu.dot_dimension_numbers<[1], [0], [0], [1], [0, 0, 1, 1], [], []>} : vector<16x128xf32>, vector<128x8xf32>, vector<16x8xf32> -> vector<16x8xf32>
    %98 = vector.extract_strided_slice %97 {offsets = [0, 0], sizes = [8, 8], strides = [1, 1]} : vector<16x8xf32> to vector<8x8xf32>
    %cst_37 = arith.constant 6.250000e-02 : f32
    %99 = vector.broadcast %cst_37 : f32 to vector<8x8xf32>
    %100 = arith.mulf %98, %99 : vector<8x8xf32>
    %101 = vector.extract_strided_slice %97 {offsets = [8, 0], sizes = [8, 8], strides = [1, 1]} : vector<16x8xf32> to vector<8x8xf32>
    %cst_38 = arith.constant 6.250000e-02 : f32
    %102 = vector.broadcast %cst_38 : f32 to vector<8x8xf32>
    %103 = arith.mulf %101, %102 : vector<8x8xf32>
    %104 = arith.mulf %100, %100 : vector<8x8xf32>
    %105 = arith.subf %103, %104 : vector<8x8xf32>
    %cst_39 = arith.constant 0.000000e+00 : f32
    %106 = vector.broadcast %cst_39 : f32 to vector<8x8xf32>
    %107 = arith.maximumf %105, %106 : vector<8x8xf32>
    %cst_40 = arith.constant 9.99999974E-6 : f32
    %108 = vector.broadcast %cst_40 : f32 to vector<8x8xf32>
    %109 = arith.addf %107, %108 : vector<8x8xf32>
    %110 = math.rsqrt %109 : vector<8x8xf32>
    %111 = tpu.concatenate %100, %110 in 0 : vector<8x8xf32>, vector<8x8xf32> -> vector<16x8xf32>
    %c0_41 = arith.constant 0 : index
    %c0_42 = arith.constant 0 : index
    %112 = vector.load %arg10[%c0_41, %c0_42] : memref<8x128xf32, #tpu.memory_space<vmem>>, vector<8x128xf32>
    %cst_43 = arith.constant dense<0.000000e+00> : vector<16x128xf32>
    %113 = tpu.matmul %111, %112, %cst_43 {dimension_numbers = #tpu.dot_dimension_numbers<[1], [0], [0], [1], [0, 0, 1, 1], [], []>} : vector<16x8xf32>, vector<8x128xf32>, vector<16x128xf32> -> vector<16x128xf32>
    %114 = vector.extract_strided_slice %113 {offsets = [0, 0], sizes = [8, 128], strides = [1, 1]} : vector<16x128xf32> to vector<8x128xf32>
    %115 = arith.subf %5, %114 : vector<8x128xf32>
    %116 = vector.extract_strided_slice %113 {offsets = [8, 0], sizes = [8, 128], strides = [1, 1]} : vector<16x128xf32> to vector<8x128xf32>
    %117 = arith.mulf %115, %116 : vector<8x128xf32>
    %c0_44 = arith.constant 0 : index
    %c0_45 = arith.constant 0 : index
    %118 = vector.load %arg11[%c0_44, %c0_45] : memref<128x32xf32, #tpu.memory_space<vmem>>, vector<128x32xf32>
    %cst_46 = arith.constant dense<0.000000e+00> : vector<8x32xf32>
    %119 = tpu.matmul %117, %118, %cst_46 {dimension_numbers = #tpu.dot_dimension_numbers<[1], [0], [0], [1], [0, 0, 1, 1], [], []>} : vector<8x128xf32>, vector<128x32xf32>, vector<8x32xf32> -> vector<8x32xf32>
    %c0_47 = arith.constant 0 : index
    %c0_48 = arith.constant 0 : index
    %120 = vector.load %arg12[%c0_47, %c0_48] : memref<32x32xf32, #tpu.memory_space<vmem>>, vector<32x32xf32>
    %c0_49 = arith.constant 0 : index
    %c0_50 = arith.constant 0 : index
    %121 = vector.load %arg13[%c0_49, %c0_50] : memref<32x32xf32, #tpu.memory_space<vmem>>, vector<32x32xf32>
    %122 = tpu.concatenate %86, %86, %86, %86 in 0 : vector<8x32xf32>, vector<8x32xf32>, vector<8x32xf32>, vector<8x32xf32> -> vector<32x32xf32>
    %123 = arith.mulf %122, %120 : vector<32x32xf32>
    %124 = tpu.concatenate %87, %87, %87, %87 in 0 : vector<8x32xf32>, vector<8x32xf32>, vector<8x32xf32>, vector<8x32xf32> -> vector<32x32xf32>
    %125 = arith.mulf %124, %120 : vector<32x32xf32>
    %126 = vector.shape_cast %6 : vector<1x8x8xf32> to vector<8x8xf32>
    %127 = tpu.concatenate %126, %126, %126, %126 in 1 : vector<8x8xf32>, vector<8x8xf32>, vector<8x8xf32>, vector<8x8xf32> -> vector<8x32xf32>
    %128 = arith.addf %119, %127 : vector<8x32xf32>
    %cst_51 = arith.constant dense<0.000000e+00> : vector<8x32xf32>
    %129 = tpu.matmul %85, %123, %cst_51 {dimension_numbers = #tpu.dot_dimension_numbers<[1], [1], [0], [0], [0, 0, 1, 0], [], []>} : vector<8x32xf32>, vector<32x32xf32>, vector<8x32xf32> -> vector<8x32xf32>
    %130 = arith.addf %129, %128 : vector<8x32xf32>
    %cst_52 = arith.constant dense<0xFF800000> : vector<8xf32>
    %131 = vector.multi_reduction <maximumf>, %130, %cst_52 [1] : vector<8x32xf32> to vector<8xf32>
    %132 = vector.shape_cast %131 : vector<8xf32> to vector<8x1xf32>
    %133 = vector.broadcast %132 : vector<8x1xf32> to vector<8x32xf32>
    %134 = arith.subf %130, %133 : vector<8x32xf32>
    %135 = math.exp %134 : vector<8x32xf32>
    %cst_53 = arith.constant dense<0.000000e+00> : vector<8x32xf32>
    %136 = tpu.matmul %135, %121, %cst_53 {dimension_numbers = #tpu.dot_dimension_numbers<[1], [0], [0], [1], [0, 0, 1, 1], [], []>} : vector<8x32xf32>, vector<32x32xf32>, vector<8x32xf32> -> vector<8x32xf32>
    %137 = tpu.reciprocal %136 {approx = true} : vector<8x32xf32> -> vector<8x32xf32>
    %138 = arith.mulf %135, %137 : vector<8x32xf32>
    %cst_54 = arith.constant dense<0.000000e+00> : vector<8x32xf32>
    %139 = tpu.matmul %138, %125, %cst_54 {dimension_numbers = #tpu.dot_dimension_numbers<[1], [0], [0], [1], [0, 0, 1, 1], [], []>} : vector<8x32xf32>, vector<32x32xf32>, vector<8x32xf32> -> vector<8x32xf32>
    %140 = arith.mulf %139, %93 : vector<8x32xf32>
    %c0_55 = arith.constant 0 : index
    %c0_56 = arith.constant 0 : index
    %141 = vector.load %arg8[%c0_55, %c0_56] : memref<32x32xf32, #tpu.memory_space<vmem>>, vector<32x32xf32>
    %cst_57 = arith.constant dense<0.000000e+00> : vector<8x32xf32>
    %142 = tpu.matmul %140, %141, %cst_57 {dimension_numbers = #tpu.dot_dimension_numbers<[1], [0], [0], [1], [0, 0, 1, 1], [], []>} : vector<8x32xf32>, vector<32x32xf32>, vector<8x32xf32> -> vector<8x32xf32>
    %143 = arith.mulf %44, %142 : vector<8x32xf32>
    %144 = arith.addf %1, %143 : vector<8x32xf32>
    %cst_58 = arith.constant dense<0.000000e+00> : vector<8xf32>
    %145 = vector.multi_reduction <add>, %144, %cst_58 [1] : vector<8x32xf32> to vector<8xf32>
    %146 = vector.shape_cast %145 : vector<8xf32> to vector<8x1xf32>
    %cst_59 = arith.constant 3.200000e+01 : f32
    %147 = vector.broadcast %cst_59 : f32 to vector<8x1xf32>
    %148 = arith.divf %146, %147 : vector<8x1xf32>
    %149 = vector.broadcast %148 : vector<8x1xf32> to vector<8x32xf32>
    %150 = arith.subf %144, %149 : vector<8x32xf32>
    %151 = arith.mulf %150, %150 : vector<8x32xf32>
    %cst_60 = arith.constant dense<0.000000e+00> : vector<8xf32>
    %152 = vector.multi_reduction <add>, %151, %cst_60 [1] : vector<8x32xf32> to vector<8xf32>
    %153 = vector.shape_cast %152 : vector<8xf32> to vector<8x1xf32>
    %cst_61 = arith.constant 3.200000e+01 : f32
    %154 = vector.broadcast %cst_61 : f32 to vector<8x1xf32>
    %155 = arith.divf %153, %154 : vector<8x1xf32>
    %156 = vector.broadcast %148 : vector<8x1xf32> to vector<8x32xf32>
    %157 = arith.subf %144, %156 : vector<8x32xf32>
    %cst_62 = arith.constant 9.99999974E-6 : f32
    %158 = vector.broadcast %cst_62 : f32 to vector<8x1xf32>
    %159 = arith.addf %155, %158 : vector<8x1xf32>
    %160 = math.rsqrt %159 : vector<8x1xf32>
    %161 = vector.broadcast %160 : vector<8x1xf32> to vector<8x32xf32>
    %162 = arith.mulf %157, %161 : vector<8x32xf32>
    %163 = arith.mulf %50, %162 : vector<8x32xf32>
    %164 = arith.addf %163, %51 : vector<8x32xf32>
    %c0_63 = arith.constant 0 : index
    %c0_64 = arith.constant 0 : index
    %165 = vector.load %arg14[%c0_63, %c0_64] : memref<32x128xf32, #tpu.memory_space<vmem>>, vector<32x128xf32>
    %cst_65 = arith.constant dense<0.000000e+00> : vector<8x128xf32>
    %166 = tpu.matmul %164, %165, %cst_65 {dimension_numbers = #tpu.dot_dimension_numbers<[1], [0], [0], [1], [0, 0, 1, 1], [], []>} : vector<8x32xf32>, vector<32x128xf32>, vector<8x128xf32> -> vector<8x128xf32>
    %167 = vector.extract_strided_slice %166 {offsets = [0, 0], sizes = [8, 64], strides = [1, 1]} : vector<8x128xf32> to vector<8x64xf32>
    %168 = vector.extract_strided_slice %166 {offsets = [0, 64], sizes = [8, 64], strides = [1, 1]} : vector<8x128xf32> to vector<8x64xf32>
    %169 = arith.negf %167 : vector<8x64xf32>
    %170 = math.exp %169 : vector<8x64xf32>
    %cst_66 = arith.constant 1.000000e+00 : f32
    %171 = vector.broadcast %cst_66 : f32 to vector<8x64xf32>
    %172 = arith.addf %171, %170 : vector<8x64xf32>
    %173 = arith.divf %171, %172 : vector<8x64xf32>
    %174 = arith.mulf %167, %173 : vector<8x64xf32>
    %175 = arith.mulf %174, %168 : vector<8x64xf32>
    %c0_67 = arith.constant 0 : index
    %c0_68 = arith.constant 0 : index
    %176 = vector.load %arg15[%c0_67, %c0_68] : memref<64x32xf32, #tpu.memory_space<vmem>>, vector<64x32xf32>
    %cst_69 = arith.constant dense<0.000000e+00> : vector<8x32xf32>
    %177 = tpu.matmul %175, %176, %cst_69 {dimension_numbers = #tpu.dot_dimension_numbers<[1], [0], [0], [1], [0, 0, 1, 1], [], []>} : vector<8x64xf32>, vector<64x32xf32>, vector<8x32xf32> -> vector<8x32xf32>
    %178 = arith.mulf %57, %177 : vector<8x32xf32>
    %179 = arith.addf %144, %178 : vector<8x32xf32>
    %180 = vector.shape_cast %179 : vector<8x32xf32> to vector<1x8x32xf32>
    %c0_70 = arith.constant 0 : index
    %c0_71 = arith.constant 0 : index
    %c0_72 = arith.constant 0 : index
    %181 = vector.load %arg16[%c0_70, %c0_71, %c0_72] : memref<1x8x32xf32, #tpu.memory_space<vmem>>, vector<1x8x32xf32>
    tpu.vector_store %arg16[%c0_70, %c0_71, %c0_72], %180 {strides = array<i32>} : memref<1x8x32xf32, #tpu.memory_space<vmem>>, vector<1x8x32xf32>,
    return
  }
  func.func @transform_0(%arg0: i32) -> (i32, i32, i32) {
    %c0_i32 = arith.constant 0 : i32
    %c0_i32_0 = arith.constant 0 : i32
    %c0_i32_1 = arith.constant 0 : i32
    return %arg0, %c0_i32, %c0_i32_0 : i32, i32, i32
  }
  func.func @transform_1(%arg0: i32) -> (i32, i32, i32) {
    %c0_i32 = arith.constant 0 : i32
    %c0_i32_0 = arith.constant 0 : i32
    %c0_i32_1 = arith.constant 0 : i32
    return %arg0, %c0_i32, %c0_i32_0 : i32, i32, i32
  }
  func.func @transform_2(%arg0: i32) -> (i32, i32, i32) {
    %c0_i32 = arith.constant 0 : i32
    %c0_i32_0 = arith.constant 0 : i32
    %c0_i32_1 = arith.constant 0 : i32
    return %arg0, %c0_i32, %c0_i32_0 : i32, i32, i32
  }
  func.func @transform_3(%arg0: i32) -> (i32, i32, i32) {
    %c0_i32 = arith.constant 0 : i32
    %c0_i32_0 = arith.constant 0 : i32
    %c0_i32_1 = arith.constant 0 : i32
    return %arg0, %c0_i32, %c0_i32_0 : i32, i32, i32
  }
  func.func @transform_4(%arg0: i32) -> (i32, i32) {
    %c0_i32 = arith.constant 0 : i32
    %c0_i32_0 = arith.constant 0 : i32
    %c0_i32_1 = arith.constant 0 : i32
    return %c0_i32, %c0_i32_0 : i32, i32
  }
  func.func @transform_5(%arg0: i32) -> (i32, i32) {
    %c0_i32 = arith.constant 0 : i32
    %c0_i32_0 = arith.constant 0 : i32
    %c0_i32_1 = arith.constant 0 : i32
    return %c0_i32, %c0_i32_0 : i32, i32
  }
  func.func @transform_6(%arg0: i32) -> (i32, i32) {
    %c0_i32 = arith.constant 0 : i32
    %c0_i32_0 = arith.constant 0 : i32
    %c0_i32_1 = arith.constant 0 : i32
    return %c0_i32, %c0_i32_0 : i32, i32
  }
  func.func @transform_7(%arg0: i32) -> (i32, i32) {
    %c0_i32 = arith.constant 0 : i32
    %c0_i32_0 = arith.constant 0 : i32
    %c0_i32_1 = arith.constant 0 : i32
    return %c0_i32, %c0_i32_0 : i32, i32
  }
  func.func @transform_8(%arg0: i32) -> (i32, i32) {
    %c0_i32 = arith.constant 0 : i32
    %c0_i32_0 = arith.constant 0 : i32
    %c0_i32_1 = arith.constant 0 : i32
    return %c0_i32, %c0_i32_0 : i32, i32
  }
  func.func @transform_9(%arg0: i32) -> (i32, i32) {
    %c0_i32 = arith.constant 0 : i32
    %c0_i32_0 = arith.constant 0 : i32
    %c0_i32_1 = arith.constant 0 : i32
    return %c0_i32, %c0_i32_0 : i32, i32
  }
  func.func @transform_10(%arg0: i32) -> (i32, i32) {
    %c0_i32 = arith.constant 0 : i32
    %c0_i32_0 = arith.constant 0 : i32
    %c0_i32_1 = arith.constant 0 : i32
    return %c0_i32, %c0_i32_0 : i32, i32
  }
  func.func @transform_11(%arg0: i32) -> (i32, i32) {
    %c0_i32 = arith.constant 0 : i32
    %c0_i32_0 = arith.constant 0 : i32
    %c0_i32_1 = arith.constant 0 : i32
    return %c0_i32, %c0_i32_0 : i32, i32
  }
  func.func @transform_12(%arg0: i32) -> (i32, i32) {
    %c0_i32 = arith.constant 0 : i32
    %c0_i32_0 = arith.constant 0 : i32
    %c0_i32_1 = arith.constant 0 : i32
    return %c0_i32, %c0_i32_0 : i32, i32
  }
  func.func @transform_13(%arg0: i32) -> (i32, i32) {
    %c0_i32 = arith.constant 0 : i32
    %c0_i32_0 = arith.constant 0 : i32
    %c0_i32_1 = arith.constant 0 : i32
    return %c0_i32, %c0_i32_0 : i32, i32
  }
  func.func @transform_14(%arg0: i32) -> (i32, i32) {
    %c0_i32 = arith.constant 0 : i32
    %c0_i32_0 = arith.constant 0 : i32
    %c0_i32_1 = arith.constant 0 : i32
    return %c0_i32, %c0_i32_0 : i32, i32
  }
  func.func @transform_15(%arg0: i32) -> (i32, i32, i32) {
    %c0_i32 = arith.constant 0 : i32
    %c0_i32_0 = arith.constant 0 : i32
    %c0_i32_1 = arith.constant 0 : i32
    return %arg0, %c0_i32, %c0_i32_0 : i32, i32, i32
  }
}

</mosaic_0001>

<llo_original>
// kernel: tpu_custom_call.1
$region0: #{tpu_custom_call.1}
  #allocation0 [shape = 'u32[]', space=smem, size = 0x4, offset = 0x4, fixed_abs, tag = 'smem constant byte address 0x4 - core index']
  #allocation1 [shape = 'u32[144,128]{1,0:T(1,128)}', space=vmem, size = 0x12000, scoped, tag = 'internal scratch']
  %s0 = inlined_call_operand.vmem [shape: f32[2,8,32], index: 0, kind: input, shape index: {}]
  %s1 = inlined_call_operand.vmem [shape: f32[2,8,32], index: 1, kind: input, shape index: {}]
  %s2 = inlined_call_operand.vmem [shape: f32[2,8,128], index: 2, kind: input, shape index: {}]
  %s3 = inlined_call_operand.vmem [shape: f32[2,8,8], index: 3, kind: input, shape index: {}]
  %s4 = inlined_call_operand.vmem [shape: f32[32,192], index: 4, kind: input, shape index: {}]
  %s5 = inlined_call_operand.vmem [shape: f32[32,128], index: 5, kind: input, shape index: {}]
  %s6 = inlined_call_operand.vmem [shape: f32[2,192], index: 6, kind: input, shape index: {}]
  %s7 = inlined_call_operand.vmem [shape: f32[32,32], index: 7, kind: input, shape index: {}]
  %s8 = inlined_call_operand.vmem [shape: f32[128,8], index: 8, kind: input, shape index: {}]
  %s9 = inlined_call_operand.vmem [shape: f32[8,128], index: 9, kind: input, shape index: {}]
  %s10 = inlined_call_operand.vmem [shape: f32[128,32], index: 10, kind: input, shape index: {}]
  %s11 = inlined_call_operand.vmem [shape: f32[32,32], index: 11, kind: input, shape index: {}]
  %s12 = inlined_call_operand.vmem [shape: f32[32,32], index: 12, kind: input, shape index: {}]
  %s13 = inlined_call_operand.vmem [shape: f32[32,128], index: 13, kind: input, shape index: {}]
  %s14 = inlined_call_operand.vmem [shape: f32[64,32], index: 14, kind: input, shape index: {}]
  %s15 = inlined_call_operand.hbm [shape: f32[2,8,32], index: 15, kind: output, shape index: {}]
  %s16 = sld [smem:[#allocation0]]
  $region93: #{tpu_custom_call.1} parent=0
    _
  %s18 = ssub.s32 1, %s16
  %s19 = scalar_select 0, %s18, %s16
  $region1: #{tpu_custom_call.1} parent=0
    #allocation2 [shape = 'u8[8192]{0}', space=vmem, size = 0x2000, scoped, tag = 'output window, operand 0']
    #allocation3 [shape = 's32[2]{0}', space=sflag, size = 0x8, scoped, tag = 'scoped memory for tpu_custom_call.1']
    %20 = vsyncpa [#allocation3], 0
    %s21 = scalar_lea.sflag [#allocation3], 1
    %22 = vsyncpa %s21, 0
    loop: start=0, step=1, limit=4
    $region2: #{tpu_custom_call.1} parent=1 // loop_pre_header
      _
    $region3: #{tpu_custom_call.1} parent=1 // loop_header
      %s24 = sphi 0, %s28
      %p25 = scmp.ge.s32.totalorder %s24, 4
      %s34 = sphi 0, %s36
      %s37 = sphi 0, %s34
      %s38 = sphi 0, %s37
      %s54 = sphi 0, %s38
      %s60 = sphi 0, %s62
      %s63 = sphi 0, %s60
      %s64 = sphi 0, %s63
      %s80 = sphi 0, %s64
      %s86 = sphi 0, %s88
      %s89 = sphi 0, %s86
      %s90 = sphi 0, %s89
      %s106 = sphi 0, %s90
      %s112 = sphi 0, %s114
      %s115 = sphi 0, %s112
      %s116 = sphi 0, %s115
      %s132 = sphi 0, %s116
      %s136 = sphi 0, %s136
      %s138 = sphi 0, %s136
      %s139 = sphi 0, %s138
      %s153 = sphi 0, %s139
      %s157 = sphi 0, %s157
      %s159 = sphi 0, %s157
      %s160 = sphi 0, %s159
      %s174 = sphi 0, %s160
      %s178 = sphi 0, %s178
      %s180 = sphi 0, %s178
      %s181 = sphi 0, %s180
      %s195 = sphi 0, %s181
      %s199 = sphi 0, %s199
      %s201 = sphi 0, %s199
      %s202 = sphi 0, %s201
      %s216 = sphi 0, %s202
      %s220 = sphi 0, %s220
      %s222 = sphi 0, %s220
      %s223 = sphi 0, %s222
      %s237 = sphi 0, %s223
      %s241 = sphi 0, %s241
      %s243 = sphi 0, %s241
      %s244 = sphi 0, %s243
      %s258 = sphi 0, %s244
      %s262 = sphi 0, %s262
      %s264 = sphi 0, %s262
      %s265 = sphi 0, %s264
      %s279 = sphi 0, %s265
      %s283 = sphi 0, %s283
      %s285 = sphi 0, %s283
      %s286 = sphi 0, %s285
      %s300 = sphi 0, %s286
      %s304 = sphi 0, %s304
      %s306 = sphi 0, %s304
      %s307 = sphi 0, %s306
      %s321 = sphi 0, %s307
      %s325 = sphi 0, %s325
      %s327 = sphi 0, %s325
      %s328 = sphi 0, %s327
      %s342 = sphi 0, %s328
      %s346 = sphi 0, %s346
      %s348 = sphi 0, %s346
      %s349 = sphi 0, %s348
      %s363 = sphi 0, %s349
      %s369 = sphi 0, %s371
      %s372 = sphi 0, %s369
      %s373 = sphi 0, %s372
      %s389 = sphi 0, %s373
    $region4: #{tpu_custom_call.1} parent=1 // loop_header_branch
      %27 = sbr.rel (%p25) target = $region8
    $region5: #{tpu_custom_call.1} parent=1 // loop_body
      %s29 = ssub.s32 %s24, 1
      %s30 = ssub.s32 %s24, 2
      %s31 = sadd.s32 %s24, 1
      %s32 = ssub.s32 %s24, %s31
      %p33 = scmp.eq.s32.totalorder %s32, 0
      %s35 = sadd.s32 %s34, 1
      %s36 = scalar_select %p33, %s34, %s35
      %p39 = pneg %p33
      %p40 = scmp.eq.s32.totalorder %s24, 1
      %p41 = por %p39, %p40
      %p42 = scmp.ne.s32.totalorder %s34, %s37
      %p43 = scmp.eq.s32.totalorder %s24, 0
      %p44 = por %p42, %p43
      %p45 = scmp.ne.s32.totalorder %s34, %s37
      %p46 = scmp.eq.s32.totalorder %s29, 1
      %p47 = por %p45, %p46
      %p48 = scmp.ne.s32.totalorder %s37, %s38
      %p49 = scmp.eq.s32.totalorder %s29, 0
      %p50 = por %p48, %p49
      %p51 = scmp.ne.s32.totalorder %s37, %s38
      %p52 = scmp.eq.s32.totalorder %s30, 1
      %p53 = por %p51, %p52
      %p55 = scmp.ne.s32.totalorder %s38, %s54
      %p56 = scmp.eq.s32.totalorder %s30, 0
      %p57 = por %p55, %p56
      %s58 = ssub.s32 %s24, %s31
      %p59 = scmp.eq.s32.totalorder %s58, 0
      %s61 = sadd.s32 %s60, 1
      %s62 = scalar_select %p59, %s60, %s61
      %p65 = pneg %p59
      %p66 = scmp.eq.s32.totalorder %s24, 1
      %p67 = por %p65, %p66
      %p68 = scmp.ne.s32.totalorder %s60, %s63
      %p69 = scmp.eq.s32.totalorder %s24, 0
      %p70 = por %p68, %p69
      %p71 = scmp.ne.s32.totalorder %s60, %s63
      %p72 = scmp.eq.s32.totalorder %s29, 1
      %p73 = por %p71, %p72
      %p74 = scmp.ne.s32.totalorder %s63, %s64
      %p75 = scmp.eq.s32.totalorder %s29, 0
      %p76 = por %p74, %p75
      %p77 = scmp.ne.s32.totalorder %s63, %s64
      %p78 = scmp.eq.s32.totalorder %s30, 1
      %p79 = por %p77, %p78
      %p81 = scmp.ne.s32.totalorder %s64, %s80
      %p82 = scmp.eq.s32.totalorder %s30, 0
      %p83 = por %p81, %p82
      %s84 = ssub.s32 %s24, %s31
      %p85 = scmp.eq.s32.totalorder %s84, 0
      %s87 = sadd.s32 %s86, 1
      %s88 = scalar_select %p85, %s86, %s87
      %p91 = pneg %p85
      %p92 = scmp.eq.s32.totalorder %s24, 1
      %p93 = por %p91, %p92
      %p94 = scmp.ne.s32.totalorder %s86, %s89
      %p95 = scmp.eq.s32.totalorder %s24, 0
      %p96 = por %p94, %p95
      %p97 = scmp.ne.s32.totalorder %s86, %s89
      %p98 = scmp.eq.s32.totalorder %s29, 1
      %p99 = por %p97, %p98
      %p100 = scmp.ne.s32.totalorder %s89, %s90
      %p101 = scmp.eq.s32.totalorder %s29, 0
      %p102 = por %p100, %p101
      %p103 = scmp.ne.s32.totalorder %s89, %s90
      %p104 = scmp.eq.s32.totalorder %s30, 1
      %p105 = por %p103, %p104
      %p107 = scmp.ne.s32.totalorder %s90, %s106
      %p108 = scmp.eq.s32.totalorder %s30, 0
      %p109 = por %p107, %p108
      %s110 = ssub.s32 %s24, %s31
      %p111 = scmp.eq.s32.totalorder %s110, 0
      %s113 = sadd.s32 %s112, 1
      %s114 = scalar_select %p111, %s112, %s113
      %p117 = pneg %p111
      %p118 = scmp.eq.s32.totalorder %s24, 1
      %p119 = por %p117, %p118
      %p120 = scmp.ne.s32.totalorder %s112, %s115
      %p121 = scmp.eq.s32.totalorder %s24, 0
      %p122 = por %p120, %p121
      %p123 = scmp.ne.s32.totalorder %s112, %s115
      %p124 = scmp.eq.s32.totalorder %s29, 1
      %p125 = por %p123, %p124
      %p126 = scmp.ne.s32.totalorder %s115, %s116
      %p127 = scmp.eq.s32.totalorder %s29, 0
      %p128 = por %p126, %p127
      %p129 = scmp.ne.s32.totalorder %s115, %s116
      %p130 = scmp.eq.s32.totalorder %s30, 1
      %p131 = por %p129, %p130
      %p133 = scmp.ne.s32.totalorder %s116, %s132
      %p134 = scmp.eq.s32.totalorder %s30, 0
      %p135 = por %p133, %p134
      %s137 = sadd.s32 %s136, 1
      %p140 = scmp.eq.s32.totalorder %s24, 1
      %p141 = scmp.ne.s32.totalorder %s136, %s138
      %p142 = scmp.eq.s32.totalorder %s24, 0
      %p143 = por %p141, %p142
      %p144 = scmp.ne.s32.totalorder %s136, %s138
      %p145 = scmp.eq.s32.totalorder %s29, 1
      %p146 = por %p144, %p145
      %p147 = scmp.ne.s32.totalorder %s138, %s139
      %p148 = scmp.eq.s32.totalorder %s29, 0
      %p149 = por %p147, %p148
      %p150 = scmp.ne.s32.totalorder %s138, %s139
      %p151 = scmp.eq.s32.totalorder %s30, 1
      %p152 = por %p150, %p151
      %p154 = scmp.ne.s32.totalorder %s139, %s153
      %p155 = scmp.eq.s32.totalorder %s30, 0
      %p156 = por %p154, %p155
      %s158 = sadd.s32 %s157, 1
      %p161 = scmp.eq.s32.totalorder %s24, 1
      %p162 = scmp.ne.s32.totalorder %s157, %s159
      %p163 = scmp.eq.s32.totalorder %s24, 0
      %p164 = por %p162, %p163
      %p165 = scmp.ne.s32.totalorder %s157, %s159
      %p166 = scmp.eq.s32.totalorder %s29, 1
      %p167 = por %p165, %p166
      %p168 = scmp.ne.s32.totalorder %s159, %s160
      %p169 = scmp.eq.s32.totalorder %s29, 0
      %p170 = por %p168, %p169
      %p171 = scmp.ne.s32.totalorder %s159, %s160
      %p172 = scmp.eq.s32.totalorder %s30, 1
      %p173 = por %p171, %p172
      %p175 = scmp.ne.s32.totalorder %s160, %s174
      %p176 = scmp.eq.s32.totalorder %s30, 0
      %p177 = por %p175, %p176
      %s179 = sadd.s32 %s178, 1
      %p182 = scmp.eq.s32.totalorder %s24, 1
      %p183 = scmp.ne.s32.totalorder %s178, %s180
      %p184 = scmp.eq.s32.totalorder %s24, 0
      %p185 = por %p183, %p184
      %p186 = scmp.ne.s32.totalorder %s178, %s180
      %p187 = scmp.eq.s32.totalorder %s29, 1
      %p188 = por %p186, %p187
      %p189 = scmp.ne.s32.totalorder %s180, %s181
      %p190 = scmp.eq.s32.totalorder %s29, 0
      %p191 = por %p189, %p190
      %p192 = scmp.ne.s32.totalorder %s180, %s181
      %p193 = scmp.eq.s32.totalorder %s30, 1
      %p194 = por %p192, %p193
      %p196 = scmp.ne.s32.totalorder %s181, %s195
      %p197 = scmp.eq.s32.totalorder %s30, 0
      %p198 = por %p196, %p197
      %s200 = sadd.s32 %s199, 1
      %p203 = scmp.eq.s32.totalorder %s24, 1
      %p204 = scmp.ne.s32.totalorder %s199, %s201
      %p205 = scmp.eq.s32.totalorder %s24, 0
      %p206 = por %p204, %p205
      %p207 = scmp.ne.s32.totalorder %s199, %s201
      %p208 = scmp.eq.s32.totalorder %s29, 1
      %p209 = por %p207, %p208
      %p210 = scmp.ne.s32.totalorder %s201, %s202
      %p211 = scmp.eq.s32.totalorder %s29, 0
      %p212 = por %p210, %p211
      %p213 = scmp.ne.s32.totalorder %s201, %s202
      %p214 = scmp.eq.s32.totalorder %s30, 1
      %p215 = por %p213, %p214
      %p217 = scmp.ne.s32.totalorder %s202, %s216
      %p218 = scmp.eq.s32.totalorder %s30, 0
      %p219 = por %p217, %p218
      %s221 = sadd.s32 %s220, 1
      %p224 = scmp.eq.s32.totalorder %s24, 1
      %p225 = scmp.ne.s32.totalorder %s220, %s222
      %p226 = scmp.eq.s32.totalorder %s24, 0
      %p227 = por %p225, %p226
      %p228 = scmp.ne.s32.totalorder %s220, %s222
      %p229 = scmp.eq.s32.totalorder %s29, 1
      %p230 = por %p228, %p229
      %p231 = scmp.ne.s32.totalorder %s222, %s223
      %p232 = scmp.eq.s32.totalorder %s29, 0
      %p233 = por %p231, %p232
      %p234 = scmp.ne.s32.totalorder %s222, %s223
      %p235 = scmp.eq.s32.totalorder %s30, 1
      %p236 = por %p234, %p235
      %p238 = scmp.ne.s32.totalorder %s223, %s237
      %p239 = scmp.eq.s32.totalorder %s30, 0
      %p240 = por %p238, %p239
      %s242 = sadd.s32 %s241, 1
      %p245 = scmp.eq.s32.totalorder %s24, 1
      %p246 = scmp.ne.s32.totalorder %s241, %s243
      %p247 = scmp.eq.s32.totalorder %s24, 0
      %p248 = por %p246, %p247
      %p249 = scmp.ne.s32.totalorder %s241, %s243
      %p250 = scmp.eq.s32.totalorder %s29, 1
      %p251 = por %p249, %p250
      %p252 = scmp.ne.s32.totalorder %s243, %s244
      %p253 = scmp.eq.s32.totalorder %s29, 0
      %p254 = por %p252, %p253
      %p255 = scmp.ne.s32.totalorder %s243, %s244
      %p256 = scmp.eq.s32.totalorder %s30, 1
      %p257 = por %p255, %p256
      %p259 = scmp.ne.s32.totalorder %s244, %s258
      %p260 = scmp.eq.s32.totalorder %s30, 0
      %p261 = por %p259, %p260
      %s263 = sadd.s32 %s262, 1
      %p266 = scmp.eq.s32.totalorder %s24, 1
      %p267 = scmp.ne.s32.totalorder %s262, %s264
      %p268 = scmp.eq.s32.totalorder %s24, 0
      %p269 = por %p267, %p268
      %p270 = scmp.ne.s32.totalorder %s262, %s264
      %p271 = scmp.eq.s32.totalorder %s29, 1
      %p272 = por %p270, %p271
      %p273 = scmp.ne.s32.totalorder %s264, %s265
      %p274 = scmp.eq.s32.totalorder %s29, 0
      %p275 = por %p273, %p274
      %p276 = scmp.ne.s32.totalorder %s264, %s265
      %p277 = scmp.eq.s32.totalorder %s30, 1
      %p278 = por %p276, %p277
      %p280 = scmp.ne.s32.totalorder %s265, %s279
      %p281 = scmp.eq.s32.totalorder %s30, 0
      %p282 = por %p280, %p281
      %s284 = sadd.s32 %s283, 1
      %p287 = scmp.eq.s32.totalorder %s24, 1
      %p288 = scmp.ne.s32.totalorder %s283, %s285
      %p289 = scmp.eq.s32.totalorder %s24, 0
      %p290 = por %p288, %p289
      %p291 = scmp.ne.s32.totalorder %s283, %s285
      %p292 = scmp.eq.s32.totalorder %s29, 1
      %p293 = por %p291, %p292
      %p294 = scmp.ne.s32.totalorder %s285, %s286
      %p295 = scmp.eq.s32.totalorder %s29, 0
      %p296 = por %p294, %p295
      %p297 = scmp.ne.s32.totalorder %s285, %s286
      %p298 = scmp.eq.s32.totalorder %s30, 1
      %p299 = por %p297, %p298
      %p301 = scmp.ne.s32.totalorder %s286, %s300
      %p302 = scmp.eq.s32.totalorder %s30, 0
      %p303 = por %p301, %p302
      %s305 = sadd.s32 %s304, 1
      %p308 = scmp.eq.s32.totalorder %s24, 1
      %p309 = scmp.ne.s32.totalorder %s304, %s306
      %p310 = scmp.eq.s32.totalorder %s24, 0
      %p311 = por %p309, %p310
      %p312 = scmp.ne.s32.totalorder %s304, %s306
      %p313 = scmp.eq.s32.totalorder %s29, 1
      %p314 = por %p312, %p313
      %p315 = scmp.ne.s32.totalorder %s306, %s307
      %p316 = scmp.eq.s32.totalorder %s29, 0
      %p317 = por %p315, %p316
      %p318 = scmp.ne.s32.totalorder %s306, %s307
      %p319 = scmp.eq.s32.totalorder %s30, 1
      %p320 = por %p318, %p319
      %p322 = scmp.ne.s32.totalorder %s307, %s321
      %p323 = scmp.eq.s32.totalorder %s30, 0
      %p324 = por %p322, %p323
      %s326 = sadd.s32 %s325, 1
      %p329 = scmp.eq.s32.totalorder %s24, 1
      %p330 = scmp.ne.s32.totalorder %s325, %s327
      %p331 = scmp.eq.s32.totalorder %s24, 0
      %p332 = por %p330, %p331
      %p333 = scmp.ne.s32.totalorder %s325, %s327
      %p334 = scmp.eq.s32.totalorder %s29, 1
      %p335 = por %p333, %p334
      %p336 = scmp.ne.s32.totalorder %s327, %s328
      %p337 = scmp.eq.s32.totalorder %s29, 0
      %p338 = por %p336, %p337
      %p339 = scmp.ne.s32.totalorder %s327, %s328
      %p340 = scmp.eq.s32.totalorder %s30, 1
      %p341 = por %p339, %p340
      %p343 = scmp.ne.s32.totalorder %s328, %s342
      %p344 = scmp.eq.s32.totalorder %s30, 0
      %p345 = por %p343, %p344
      %s347 = sadd.s32 %s346, 1
      %p350 = scmp.eq.s32.totalorder %s24, 1
      %p351 = scmp.ne.s32.totalorder %s346, %s348
      %p352 = scmp.eq.s32.totalorder %s24, 0
      %p353 = por %p351, %p352
      %p354 = scmp.ne.s32.totalorder %s346, %s348
      %p355 = scmp.eq.s32.totalorder %s29, 1
      %p356 = por %p354, %p355
      %p357 = scmp.ne.s32.totalorder %s348, %s349
      %p358 = scmp.eq.s32.totalorder %s29, 0
      %p359 = por %p357, %p358
      %p360 = scmp.ne.s32.totalorder %s348, %s349
      %p361 = scmp.eq.s32.totalorder %s30, 1
      %p362 = por %p360, %p361
      %p364 = scmp.ne.s32.totalorder %s349, %s363
      %p365 = scmp.eq.s32.totalorder %s30, 0
      %p366 = por %p364, %p365
      %s367 = ssub.s32 %s24, %s31
      %p368 = scmp.eq.s32.totalorder %s367, 0
      %s370 = sadd.s32 %s369, 1
      %s371 = scalar_select %p368, %s369, %s370
      %p374 = pneg %p368
      %p375 = scmp.eq.s32.totalorder %s24, 1
      %p376 = por %p374, %p375
      %p377 = scmp.ne.s32.totalorder %s369, %s372
      %p378 = scmp.eq.s32.totalorder %s24, 0
      %p379 = por %p377, %p378
      %p380 = scmp.ne.s32.totalorder %s369, %s372
      %p381 = scmp.eq.s32.totalorder %s29, 1
      %p382 = por %p380, %p381
      %p383 = scmp.ne.s32.totalorder %s372, %s373
      %p384 = scmp.eq.s32.totalorder %s29, 0
      %p385 = por %p383, %p384
      %p386 = scmp.ne.s32.totalorder %s372, %s373
      %p387 = scmp.eq.s32.totalorder %s30, 1
      %p388 = por %p386, %p387
      %p390 = scmp.ne.s32.totalorder %s373, %s389
      %p391 = scmp.eq.s32.totalorder %s30, 0
      %p392 = por %p390, %p391
      %p393 = scmp.le.s32.totalorder 1, %s24
      %p394 = scmp.lt.s32.totalorder %s24, 3
      %p395 = pnand %p393, %p394
      %p396 = pneg %p395
      // Predicated region
      $region9: #{tpu_custom_call.1} parent=5 // pred_check
        _
      $region10: #{tpu_custom_call.1} parent=5 // pred_check_branch
        %398 = sbr.rel (%p395) target = $region12
      $region11: #{tpu_custom_call.1} parent=5 // pred_region
        %s399 = ssub.s32 %s24, 1
        // Predicated region
        $region13: #{tpu_custom_call.1} parent=11 // pred_check
          %p400 = pneg %p149
        $region14: #{tpu_custom_call.1} parent=11 // pred_check_branch
          %402 = sbr.rel (%p400) target = $region16
        $region15: #{tpu_custom_call.1} parent=11 // pred_region
          _
        $region16: #{tpu_custom_call.1} parent=11 // pred_fallthru
          _
        // Predicated region
        $region17: #{tpu_custom_call.1} parent=11 // pred_check
          %p403 = pneg %p170
        $region18: #{tpu_custom_call.1} parent=11 // pred_check_branch
          %405 = sbr.rel (%p403) target = $region20
        $region19: #{tpu_custom_call.1} parent=11 // pred_region
          _
        $region20: #{tpu_custom_call.1} parent=11 // pred_fallthru
          _
        // Predicated region
        $region21: #{tpu_custom_call.1} parent=11 // pred_check
          %p406 = pneg %p191
        $region22: #{tpu_custom_call.1} parent=11 // pred_check_branch
          %408 = sbr.rel (%p406) target = $region24
        $region23: #{tpu_custom_call.1} parent=11 // pred_region
          _
        $region24: #{tpu_custom_call.1} parent=11 // pred_fallthru
          _
        // Predicated region
        $region25: #{tpu_custom_call.1} parent=11 // pred_check
          %p409 = pneg %p212
        $region26: #{tpu_custom_call.1} parent=11 // pred_check_branch
          %411 = sbr.rel (%p409) target = $region28
        $region27: #{tpu_custom_call.1} parent=11 // pred_region
          _
        $region28: #{tpu_custom_call.1} parent=11 // pred_fallthru
          _
        // Predicated region
        $region29: #{tpu_custom_call.1} parent=11 // pred_check
          %p412 = pneg %p233
        $region30: #{tpu_custom_call.1} parent=11 // pred_check_branch
          %414 = sbr.rel (%p412) target = $region32
        $region31: #{tpu_custom_call.1} parent=11 // pred_region
          _
        $region32: #{tpu_custom_call.1} parent=11 // pred_fallthru
          _
        // Predicated region
        $region33: #{tpu_custom_call.1} parent=11 // pred_check
          %p415 = pneg %p254
        $region34: #{tpu_custom_call.1} parent=11 // pred_check_branch
          %417 = sbr.rel (%p415) target = $region36
        $region35: #{tpu_custom_call.1} parent=11 // pred_region
          _
        $region36: #{tpu_custom_call.1} parent=11 // pred_fallthru
          _
        // Predicated region
        $region37: #{tpu_custom_call.1} parent=11 // pred_check
          %p418 = pneg %p275
        $region38: #{tpu_custom_call.1} parent=11 // pred_check_branch
          %420 = sbr.rel (%p418) target = $region40
        $region39: #{tpu_custom_call.1} parent=11 // pred_region
          _
        $region40: #{tpu_custom_call.1} parent=11 // pred_fallthru
          _
        // Predicated region
        $region41: #{tpu_custom_call.1} parent=11 // pred_check
          %p421 = pneg %p296
        $region42: #{tpu_custom_call.1} parent=11 // pred_check_branch
          %423 = sbr.rel (%p421) target = $region44
        $region43: #{tpu_custom_call.1} parent=11 // pred_region
          _
        $region44: #{tpu_custom_call.1} parent=11 // pred_fallthru
          _
        // Predicated region
        $region45: #{tpu_custom_call.1} parent=11 // pred_check
          %p424 = pneg %p317
        $region46: #{tpu_custom_call.1} parent=11 // pred_check_branch
          %426 = sbr.rel (%p424) target = $region48
        $region47: #{tpu_custom_call.1} parent=11 // pred_region
          _
        $region48: #{tpu_custom_call.1} parent=11 // pred_fallthru
          _
        // Predicated region
        $region49: #{tpu_custom_call.1} parent=11 // pred_check
          %p427 = pneg %p338
        $region50: #{tpu_custom_call.1} parent=11 // pred_check_branch
          %429 = sbr.rel (%p427) target = $region52
        $region51: #{tpu_custom_call.1} parent=11 // pred_region
          _
        $region52: #{tpu_custom_call.1} parent=11 // pred_fallthru
          _
        // Predicated region
        $region53: #{tpu_custom_call.1} parent=11 // pred_check
          %p430 = pneg %p359
        $region54: #{tpu_custom_call.1} parent=11 // pred_check_branch
          %432 = sbr.rel (%p430) target = $region56
        $region55: #{tpu_custom_call.1} parent=11 // pred_region
          _
        $region56: #{tpu_custom_call.1} parent=11 // pred_fallthru
          _
      $region12: #{tpu_custom_call.1} parent=5 // pred_fallthru
        _
      %p433 = scmp.lt.s32.totalorder %s24, 2
      // Predicated region
      $region57: #{tpu_custom_call.1} parent=5 // pred_check
        %p434 = pneg %p433
      $region58: #{tpu_custom_call.1} parent=5 // pred_check_branch
        %436 = sbr.rel (%p434) target = $region60
      $region59: #{tpu_custom_call.1} parent=5 // pred_region
        // Predicated region
        $region61: #{tpu_custom_call.1} parent=59 // pred_check
          %p437 = pneg %p44
        $region62: #{tpu_custom_call.1} parent=59 // pred_check_branch
          %439 = sbr.rel (%p437) target = $region64
        $region63: #{tpu_custom_call.1} parent=59 // pred_region
          %p440 = scmp.lt.s32.totalorder %s24, 1
          %s441 = scalar_select %p440, %s24, 1
          %s442 = smul.addr %s441, 8
          %s443 = scalar_lea.vmem %s0, %s442
        $region64: #{tpu_custom_call.1} parent=59 // pred_fallthru
          _
        // Predicated region
        $region65: #{tpu_custom_call.1} parent=59 // pred_check
          %p444 = pneg %p70
        $region66: #{tpu_custom_call.1} parent=59 // pred_check_branch
          %446 = sbr.rel (%p444) target = $region68
        $region67: #{tpu_custom_call.1} parent=59 // pred_region
          %p447 = scmp.lt.s32.totalorder %s24, 1
          %s448 = scalar_select %p447, %s24, 1
          %s449 = smul.addr %s448, 8
          %s450 = scalar_lea.vmem %s1, %s449
        $region68: #{tpu_custom_call.1} parent=59 // pred_fallthru
          _
        // Predicated region
        $region69: #{tpu_custom_call.1} parent=59 // pred_check
          %p451 = pneg %p96
        $region70: #{tpu_custom_call.1} parent=59 // pred_check_branch
          %453 = sbr.rel (%p451) target = $region72
        $region71: #{tpu_custom_call.1} parent=59 // pred_region
          %p454 = scmp.lt.s32.totalorder %s24, 1
          %s455 = scalar_select %p454, %s24, 1
          %s456 = smul.addr %s455, 8
          %s457 = scalar_lea.vmem %s2, %s456
        $region72: #{tpu_custom_call.1} parent=59 // pred_fallthru
          _
        // Predicated region
        $region73: #{tpu_custom_call.1} parent=59 // pred_check
          %p458 = pneg %p122
        $region74: #{tpu_custom_call.1} parent=59 // pred_check_branch
          %460 = sbr.rel (%p458) target = $region76
        $region75: #{tpu_custom_call.1} parent=59 // pred_region
          %p461 = scmp.lt.s32.totalorder %s24, 1
          %s462 = scalar_select %p461, %s24, 1
          %s463 = smul.addr %s462, 8
          %s464 = scalar_lea.vmem %s3, %s463
        $region76: #{tpu_custom_call.1} parent=59 // pred_fallthru
          _
      $region60: #{tpu_custom_call.1} parent=5 // pred_fallthru
        _
      %p465 = scmp.le.s32.totalorder 1, %s24
      %p466 = scmp.lt.s32.totalorder %s24, 3
      %p467 = pnand %p465, %p466
      %p468 = pneg %p467
      // Predicated region
      $region77: #{tpu_custom_call.1} parent=5 // pred_check
        _
      $region78: #{tpu_custom_call.1} parent=5 // pred_check_branch
        %470 = sbr.rel (%p467) target = $region80
      $region79: #{tpu_custom_call.1} parent=5 // pred_region
        %s471 = ssub.s32 %s24, 1
        %p472 = scmp.lt.s32.totalorder %s29, 1
        %s473 = scalar_select %p472, %s29, 1
        %s474 = smul.addr %s473, 8
        %s475 = scalar_lea.vmem %s0, %s474
        %p476 = pneg %p50
        %p477 = pneg %p47
        %p478 = scmp.lt.s32.totalorder %s29, 1
        %s479 = scalar_select %p478, %s29, 1
        %s480 = smul.addr %s479, 8
        %s481 = scalar_lea.vmem %s1, %s480
        %p482 = pneg %p76
        %p483 = pneg %p73
        %p484 = scmp.lt.s32.totalorder %s29, 1
        %s485 = scalar_select %p484, %s29, 1
        %s486 = smul.addr %s485, 8
        %s487 = scalar_lea.vmem %s2, %s486
        %p488 = pneg %p102
        %p489 = pneg %p99
        %p490 = scmp.lt.s32.totalorder %s29, 1
        %s491 = scalar_select %p490, %s29, 1
        %s492 = smul.addr %s491, 8
        %s493 = scalar_lea.vmem %s3, %s492
        %p494 = pneg %p128
        %p495 = pneg %p125
        %p496 = pneg %p149
        %p497 = pneg %p146
        %p498 = pneg %p170
        %p499 = pneg %p167
        %p500 = pneg %p191
        %p501 = pneg %p188
        %p502 = pneg %p212
        %p503 = pneg %p209
        %p504 = pneg %p233
        %p505 = pneg %p230
        %p506 = pneg %p254
        %p507 = pneg %p251
        %p508 = pneg %p275
        %p509 = pneg %p272
        %p510 = pneg %p296
        %p511 = pneg %p293
        %p512 = pneg %p317
        %p513 = pneg %p314
        %p514 = pneg %p338
        %p515 = pneg %p335
        %p516 = pneg %p359
        %p517 = pneg %p356
        %p518 = pneg %p385
        %p519 = pneg %p382
        %s520 = sand.u32 %s372, 1
        %s521 = scalar_lea.sflag [#allocation3], %s520
        %s522 = sand.u32 %s372, 1
        %s523 = smul.addr %s522, 8
        %s524 = scalar_lea.vmem [#allocation2], %s523
        %p525 = scmp.lt.s32.totalorder %s29, 1
        %s526 = scalar_select %p525, %s29, 1
        %s527 = smul.addr %s526, 8
        %s528 = scalar_lea.vmem %s0, %s527
        %p529 = scmp.lt.s32.totalorder %s29, 1
        %s530 = scalar_select %p529, %s29, 1
        %s531 = smul.addr %s530, 8
        %s532 = scalar_lea.vmem %s1, %s531
        %p533 = scmp.lt.s32.totalorder %s29, 1
        %s534 = scalar_select %p533, %s29, 1
        %s535 = smul.addr %s534, 8
        %s536 = scalar_lea.vmem %s2, %s535
        %p537 = scmp.lt.s32.totalorder %s29, 1
        %s538 = scalar_select %p537, %s29, 1
        %s539 = smul.addr %s538, 8
        %s540 = scalar_lea.vmem %s3, %s539
        %v541 = vld [vmem:[%s528] sm:$0xff]
        %v542 = vld [vmem:[%s532] sm:$0xff]
        %v543 = vld [vmem:[%s536] sm:$0xff]
        %v544 = vld [vmem:[%s540] sm:$0xff]
        %vm545 = vcmask 261120
        %v546 = vsel %vm545, %v542, 0.0
        %547 = vadd.xlane.f32.xlu0 %v546
        %v548 = vpop.xlane.xlu0 %547
        %v549 = vrcp.pop 32.0
        %v550 = vmul.f32 %v548, %v549
        %v551 = vsub.f32 %v542, %v550
        %v552 = vmul.f32 %v551, %v551
        %v553 = vsel %vm545, %v552, 0.0
        %554 = vadd.xlane.f32.xlu0 %v553
        %v555 = vpop.xlane.xlu0 %554
        %v556 = vmul.f32 %v555, %v549
        %v557 = vadd.f32 %v556, 1e-05
        %v558 = vrsqrt.pop %v557
        %v559 = vmul.f32 %v551, %v558
        %v560 = vld [vmem:[%s4] sm:$0xff]
        %v561 = vld [vmem:[%s4 + $0x8] sm:$0xff]
        %v562 = vld [vmem:[%s4 + $0x10] sm:$0xff]
        %v563 = vld [vmem:[%s4 + $0x18] sm:$0xff]
        %v564 = vld [vmem:[%s4 + $0x20] sm:$0xff]
        %v565 = vld [vmem:[%s4 + $0x28] sm:$0xff]
        %v566 = vld [vmem:[%s4 + $0x30] sm:$0xff]
        %v567 = vld [vmem:[%s4 + $0x38] sm:$0xff]
        %v568 = vld [vmem:[%s6] ss:$2 sm:$0x3]
        %v570 = vlaneseq
        %v571 = vshrl.u32 %v570, 7
        %v572 = vsub.s32 0, %v571
        %v573 = vrot.slane %v568, %v572
        %v574 = vlaneseq
        %v575 = vshrl.u32 %v574, 7
        %v576 = vsub.s32 1, %v575
        %v577 = vrot.slane %v568, %v576
        %v581 = vsel %vm545, %v559, 0
        %583 = vmatprep.subr.mxu0 %v561
        %584 = vmatpush1.msra.mxu0 %v560
        %585 = vmatprep.subr.mxu0 %v563
        %586 = vmatpush1.msra.mxu0 %v562
        %587 = vmatprep.subr.mxu0 %v565
        %588 = vmatpush1.msra.mxu0 %v564
        %589 = vmatprep.subr.mxu0 %v567
        %590 = vmatpush1.msra.mxu0 %v566
        %591 = vmatprep.subr.mxu0 0.0
        %592 = vmatpush1.msra.mxu0 0.0
        %593 = vmatprep.subr.mxu0 0.0
        %594 = vmatpush1.msra.mxu0 0.0
        %595 = vmatprep.subr.mxu0 0.0
        %596 = vmatpush1.msra.mxu0 0.0
        %597 = vmatprep.subr.mxu0 0.0
        %598 = vmatpush1.msra.mxu0 0.0
        %599 = vmatprep.subr.mxu0 0.0
        %600 = vmatpush1.msra.mxu0 0.0
        %601 = vmatprep.subr.mxu0 0.0
        %602 = vmatpush1.msra.mxu0 0.0
        %603 = vmatprep.subr.mxu0 0.0
        %604 = vmatpush1.msra.mxu0 0.0
        %605 = vmatprep.subr.mxu0 0.0
        %606 = vmatpush1.msra.mxu0 0.0
        %607 = vmatprep.subr.mxu0 0.0
        %608 = vmatpush1.msra.mxu0 0.0
        %609 = vmatprep.subr.mxu0 0.0
        %610 = vmatpush1.msra.mxu0 0.0
        %611 = vmatprep.subr.mxu0 0.0
        %612 = vmatpush1.msra.mxu0 0.0
        %613 = vmatprep.subr.mxu0 0.0
        %614 = vmatpush1.msra.mxu0 0.0
        %615 = vmatprep.subr.mxu0 0.0
        %616 = vmatpush1.msra.mxu0 0.0
        %617 = vmatprep.subr.mxu0 0.0
        %618 = vmatpush1.msra.mxu0 0.0
        %619 = vmatprep.subr.mxu0 0.0
        %620 = vmatpush1.msra.mxu0 0.0
        %621 = vmatprep.subr.mxu0 0.0
        %622 = vmatpush1.msra.mxu0 0.0
        %623 = vmatprep.subr.mxu0 0.0
        %624 = vmatpush1.msra.mxu0 0.0
        %625 = vmatprep.subr.mxu0 0.0
        %626 = vmatpush1.msra.mxu0 0.0
        %627 = vmatprep.subr.mxu0 0.0
        %628 = vmatpush1.msra.mxu0 0.0
        %629 = vmatprep.subr.mxu0 0.0
        %630 = vmatpush1.msra.mxu0 0.0
        %631 = vmatprep.subr.mxu0 0.0
        %632 = vmatpush1.msra.mxu0 0.0
        %633 = vmatprep.subr.mxu0 0.0
        %634 = vmatpush1.msra.mxu0 0.0
        %635 = vmatprep.subr.mxu0 0.0
        %636 = vmatpush1.msra.mxu0 0.0
        %637 = vmatprep.subr.mxu0 0.0
        %638 = vmatpush1.msra.mxu0 0.0
        %639 = vmatprep.subr.mxu0 0.0
        %640 = vmatpush1.msra.mxu0 0.0
        %641 = vmatprep.subr.mxu0 0.0
        %642 = vmatpush1.msra.mxu0 0.0
        %643 = vmatprep.subr.mxu0 0.0
        %644 = vmatpush1.msra.mxu0 0.0
        %645 = vmatprep.subr.mxu0 0.0
        %646 = vmatpush1.msra.mxu0 0.0
        %647 = vmatprep.mubr.f32.mxu0 0.0
        %648 = vmatmul.mubr.f32.gmra.mrb[0].mxu0 %v581
        %v649 = vpop.f32.mrb[0].mxu0
        %v650 = vadd.f32 %v573, %v649
        %v651 = vpop.f32.mrb[0].mxu0
        %v652 = vadd.f32 %v577, %v651
        %653 = vdwg.mxu0
        %v654 = vxor.u32 %v650, 2147483648
        %v655 = vmul.f32 %v654, 1.442695
        %v656 = vpow.pop %v655
        %v657 = vadd.f32 %v656, 1.0
        %v658 = vrcp.pop %v657
        %v659 = vmul.f32 1.0, %v658
        %v660 = vxor.u32 %v652, 2147483648
        %v661 = vmul.f32 %v660, 1.442695
        %v662 = vpow.pop %v661
        %v663 = vadd.f32 %v662, 1.0
        %v664 = vrcp.pop %v663
        %v665 = vmul.f32 1.0, %v664
        %v666 = vsel %vm545, %v541, 0.0
        %667 = vadd.xlane.f32.xlu0 %v666
        %v668 = vpop.xlane.xlu0 %667
        %v669 = vmul.f32 %v668, %v549
        %v670 = vsub.f32 %v541, %v669
        %v671 = vmul.f32 %v670, %v670
        %v672 = vsel %vm545, %v671, 0.0
        %673 = vadd.xlane.f32.xlu0 %v672
        %v674 = vpop.xlane.xlu0 %673
        %v675 = vmul.f32 %v674, %v549
        %v676 = vadd.f32 %v675, 1e-05
        %v677 = vrsqrt.pop %v676
        %v678 = vmul.f32 %v670, %v677
        %v679 = vmul.f32 %v659, %v678
        %681 = vrot.lane.b32.xlu0 %v650, 96
        %v682 = vpop.permute.xlu0 %681
        %v684 = vadd.f32 %v679, %v682
        %v685 = vld [vmem:[%s5] sm:$0xff]
        %v686 = vld [vmem:[%s5 + $0x8] sm:$0xff]
        %v687 = vld [vmem:[%s5 + $0x10] sm:$0xff]
        %v688 = vld [vmem:[%s5 + $0x18] sm:$0xff]
        %v689 = vld [vmem:[%s6 + $0x1] sm:$0x1]
        %v690 = vlaneseq
        %v691 = vshrl.u32 %v690, 7
        %v692 = vsub.s32 0, %v691
        %v693 = vrot.slane %v689, %v692
        %v695 = vsel %vm545, %v684, 0
        %697 = vmatprep.subr.mxu0 0.0
        %698 = vmatpush1.msra.mxu0 %v685
        %699 = vmatprep.subr.mxu0 0.0
        %700 = vmatpush1.msra.mxu0 %v686
        %701 = vmatprep.subr.mxu0 0.0
        %702 = vmatpush1.msra.mxu0 %v687
        %703 = vmatprep.subr.mxu0 0.0
        %704 = vmatpush1.msra.mxu0 %v688
        %705 = vmatprep.subr.mxu0 0.0
        %706 = vmatpush1.msra.mxu0 0.0
        %707 = vmatprep.subr.mxu0 0.0
        %708 = vmatpush1.msra.mxu0 0.0
        %709 = vmatprep.subr.mxu0 0.0
        %710 = vmatpush1.msra.mxu0 0.0
        %711 = vmatprep.subr.mxu0 0.0
        %712 = vmatpush1.msra.mxu0 0.0
        %713 = vmatprep.subr.mxu0 0.0
        %714 = vmatpush1.msra.mxu0 0.0
        %715 = vmatprep.subr.mxu0 0.0
        %716 = vmatpush1.msra.mxu0 0.0
        %717 = vmatprep.subr.mxu0 0.0
        %718 = vmatpush1.msra.mxu0 0.0
        %719 = vmatprep.subr.mxu0 0.0
        %720 = vmatpush1.msra.mxu0 0.0
        %721 = vmatprep.subr.mxu0 0.0
        %722 = vmatpush1.msra.mxu0 0.0
        %723 = vmatprep.subr.mxu0 0.0
        %724 = vmatpush1.msra.mxu0 0.0
        %725 = vmatprep.subr.mxu0 0.0
        %726 = vmatpush1.msra.mxu0 0.0
        %727 = vmatprep.subr.mxu0 0.0
        %728 = vmatpush1.msra.mxu0 0.0
        %729 = vmatprep.subr.mxu0 0.0
        %730 = vmatpush1.msra.mxu0 0.0
        %731 = vmatprep.subr.mxu0 0.0
        %732 = vmatpush1.msra.mxu0 0.0
        %733 = vmatprep.subr.mxu0 0.0
        %734 = vmatpush1.msra.mxu0 0.0
        %735 = vmatprep.subr.mxu0 0.0
        %736 = vmatpush1.msra.mxu0 0.0
        %737 = vmatprep.subr.mxu0 0.0
        %738 = vmatpush1.msra.mxu0 0.0
        %739 = vmatprep.subr.mxu0 0.0
        %740 = vmatpush1.msra.mxu0 0.0
        %741 = vmatprep.subr.mxu0 0.0
        %742 = vmatpush1.msra.mxu0 0.0
        %743 = vmatprep.subr.mxu0 0.0
        %744 = vmatpush1.msra.mxu0 0.0
        %745 = vmatprep.subr.mxu0 0.0
        %746 = vmatpush1.msra.mxu0 0.0
        %747 = vmatprep.subr.mxu0 0.0
        %748 = vmatpush1.msra.mxu0 0.0
        %749 = vmatprep.subr.mxu0 0.0
        %750 = vmatpush1.msra.mxu0 0.0
        %751 = vmatprep.subr.mxu0 0.0
        %752 = vmatpush1.msra.mxu0 0.0
        %753 = vmatprep.subr.mxu0 0.0
        %754 = vmatpush1.msra.mxu0 0.0
        %755 = vmatprep.subr.mxu0 0.0
        %756 = vmatpush1.msra.mxu0 0.0
        %757 = vmatprep.subr.mxu0 0.0
        %758 = vmatpush1.msra.mxu0 0.0
        %759 = vmatprep.subr.mxu0 0.0
        %760 = vmatpush1.msra.mxu0 0.0
        %761 = vmatprep.mubr.f32.mxu0 0.0
        %762 = vmatmul.mubr.f32.gmra.mrb[0].mxu0 %v695
        %v763 = vpop.f32.mrb[0].mxu0
        %v764 = vadd.f32 %v693, %v763
        %v765 = vpop.f32.mrb[0].mxu0
        %766 = vdwg.mxu0
        %v767 = vxor.u32 %v764, 2147483648
        %v768 = vmul.f32 %v767, 1.442695
        %v769 = vpow.pop %v768
        %v770 = vadd.f32 %v769, 1.0
        %v771 = vrcp.pop %v770
        %v772 = vmul.f32 1.0, %v771
        %v773 = vmul.f32 %v543, %v543
        %v774 = vld [vmem:[%s8] sm:$0xff]
        %v775 = vld [vmem:[%s8 + $0x8] sm:$0xff]
        %v776 = vld [vmem:[%s8 + $0x10] sm:$0xff]
        %v777 = vld [vmem:[%s8 + $0x18] sm:$0xff]
        %v778 = vld [vmem:[%s8 + $0x20] sm:$0xff]
        %v779 = vld [vmem:[%s8 + $0x28] sm:$0xff]
        %v780 = vld [vmem:[%s8 + $0x30] sm:$0xff]
        %v781 = vld [vmem:[%s8 + $0x38] sm:$0xff]
        %v782 = vld [vmem:[%s8 + $0x40] sm:$0xff]
        %v783 = vld [vmem:[%s8 + $0x48] sm:$0xff]
        %v784 = vld [vmem:[%s8 + $0x50] sm:$0xff]
        %v785 = vld [vmem:[%s8 + $0x58] sm:$0xff]
        %v786 = vld [vmem:[%s8 + $0x60] sm:$0xff]
        %v787 = vld [vmem:[%s8 + $0x68] sm:$0xff]
        %v788 = vld [vmem:[%s8 + $0x70] sm:$0xff]
        %v789 = vld [vmem:[%s8 + $0x78] sm:$0xff]
        %790 = vmatprep.subr.mxu0 0.0
        %791 = vmatpush1.msra.mxu0 %v774
        %792 = vmatprep.subr.mxu0 0.0
        %793 = vmatpush1.msra.mxu0 %v775
        %794 = vmatprep.subr.mxu0 0.0
        %795 = vmatpush1.msra.mxu0 %v776
        %796 = vmatprep.subr.mxu0 0.0
        %797 = vmatpush1.msra.mxu0 %v777
        %798 = vmatprep.subr.mxu0 0.0
        %799 = vmatpush1.msra.mxu0 %v778
        %800 = vmatprep.subr.mxu0 0.0
        %801 = vmatpush1.msra.mxu0 %v779
        %802 = vmatprep.subr.mxu0 0.0
        %803 = vmatpush1.msra.mxu0 %v780
        %804 = vmatprep.subr.mxu0 0.0
        %805 = vmatpush1.msra.mxu0 %v781
        %806 = vmatprep.subr.mxu0 0.0
        %807 = vmatpush1.msra.mxu0 %v782
        %808 = vmatprep.subr.mxu0 0.0
        %809 = vmatpush1.msra.mxu0 %v783
        %810 = vmatprep.subr.mxu0 0.0
        %811 = vmatpush1.msra.mxu0 %v784
        %812 = vmatprep.subr.mxu0 0.0
        %813 = vmatpush1.msra.mxu0 %v785
        %814 = vmatprep.subr.mxu0 0.0
        %815 = vmatpush1.msra.mxu0 %v786
        %816 = vmatprep.subr.mxu0 0.0
        %817 = vmatpush1.msra.mxu0 %v787
        %818 = vmatprep.subr.mxu0 0.0
        %819 = vmatpush1.msra.mxu0 %v788
        %820 = vmatprep.subr.mxu0 0.0
        %821 = vmatpush1.msra.mxu0 %v789
        %822 = vmatprep.subr.mxu0 0.0
        %823 = vmatpush1.msra.mxu0 0.0
        %824 = vmatprep.subr.mxu0 0.0
        %825 = vmatpush1.msra.mxu0 0.0
        %826 = vmatprep.subr.mxu0 0.0
        %827 = vmatpush1.msra.mxu0 0.0
        %828 = vmatprep.subr.mxu0 0.0
        %829 = vmatpush1.msra.mxu0 0.0
        %830 = vmatprep.subr.mxu0 0.0
        %831 = vmatpush1.msra.mxu0 0.0
        %832 = vmatprep.subr.mxu0 0.0
        %833 = vmatpush1.msra.mxu0 0.0
        %834 = vmatprep.subr.mxu0 0.0
        %835 = vmatpush1.msra.mxu0 0.0
        %836 = vmatprep.subr.mxu0 0.0
        %837 = vmatpush1.msra.mxu0 0.0
        %838 = vmatprep.subr.mxu0 0.0
        %839 = vmatpush1.msra.mxu0 0.0
        %840 = vmatprep.subr.mxu0 0.0
        %841 = vmatpush1.msra.mxu0 0.0
        %842 = vmatprep.subr.mxu0 0.0
        %843 = vmatpush1.msra.mxu0 0.0
        %844 = vmatprep.subr.mxu0 0.0
        %845 = vmatpush1.msra.mxu0 0.0
        %846 = vmatprep.subr.mxu0 0.0
        %847 = vmatpush1.msra.mxu0 0.0
        %848 = vmatprep.subr.mxu0 0.0
        %849 = vmatpush1.msra.mxu0 0.0
        %850 = vmatprep.subr.mxu0 0.0
        %851 = vmatpush1.msra.mxu0 0.0
        %852 = vmatprep.subr.mxu0 0.0
        %853 = vmatpush1.msra.mxu0 0.0
        %854 = vmatprep.mubr.f32.mxu0 0.0
        %855 = vmatmul.mubr.f32.gmra.mrb[0].mxu0 %v543
        %v856 = vpop.f32.mrb[0].mxu0
        %v857 = vadd.f32 0.0, %v856
        %v858 = vpop.f32.mrb[0].mxu0
        %859 = vmatprep.mubr.f32.mxu0 0.0
        %860 = vmatmul.mubr.f32.gmra.mrb[0].mxu0 %v773
        %v861 = vpop.f32.mrb[0].mxu0
        %v862 = vadd.f32 0.0, %v861
        %v863 = vpop.f32.mrb[0].mxu0
        %864 = vdwg.mxu0
        %v865 = vmul.f32 %v857, 0.0625
        %v866 = vmul.f32 %v862, 0.0625
        %v867 = vmul.f32 %v865, %v865
        %v868 = vsub.f32 %v866, %v867
        %v869 = vmax.f32 %v868, 0.0
        %v870 = vadd.f32 %v869, 1e-05
        %v871 = vrsqrt.pop %v870
        %v872 = vld [vmem:[%s9] sm:$0xff]
        %vm873 = vcmask 64512
        %v875 = vsel %vm873, %v865, 0
        %v878 = vsel %vm873, %v871, 0
        %880 = vmatprep.subr.mxu0 0.0
        %881 = vmatpush1.msra.mxu0 %v872
        %882 = vmatprep.subr.mxu0 0.0
        %883 = vmatpush1.msra.mxu0 0.0
        %884 = vmatprep.subr.mxu0 0.0
        %885 = vmatpush1.msra.mxu0 0.0
        %886 = vmatprep.subr.mxu0 0.0
        %887 = vmatpush1.msra.mxu0 0.0
        %888 = vmatprep.subr.mxu0 0.0
        %889 = vmatpush1.msra.mxu0 0.0
        %890 = vmatprep.subr.mxu0 0.0
        %891 = vmatpush1.msra.mxu0 0.0
        %892 = vmatprep.subr.mxu0 0.0
        %893 = vmatpush1.msra.mxu0 0.0
        %894 = vmatprep.subr.mxu0 0.0
        %895 = vmatpush1.msra.mxu0 0.0
        %896 = vmatprep.subr.mxu0 0.0
        %897 = vmatpush1.msra.mxu0 0.0
        %898 = vmatprep.subr.mxu0 0.0
        %899 = vmatpush1.msra.mxu0 0.0
        %900 = vmatprep.subr.mxu0 0.0
        %901 = vmatpush1.msra.mxu0 0.0
        %902 = vmatprep.subr.mxu0 0.0
        %903 = vmatpush1.msra.mxu0 0.0
        %904 = vmatprep.subr.mxu0 0.0
        %905 = vmatpush1.msra.mxu0 0.0
        %906 = vmatprep.subr.mxu0 0.0
        %907 = vmatpush1.msra.mxu0 0.0
        %908 = vmatprep.subr.mxu0 0.0
        %909 = vmatpush1.msra.mxu0 0.0
        %910 = vmatprep.subr.mxu0 0.0
        %911 = vmatpush1.msra.mxu0 0.0
        %912 = vmatprep.subr.mxu0 0.0
        %913 = vmatpush1.msra.mxu0 0.0
        %914 = vmatprep.subr.mxu0 0.0
        %915 = vmatpush1.msra.mxu0 0.0
        %916 = vmatprep.subr.mxu0 0.0
        %917 = vmatpush1.msra.mxu0 0.0
        %918 = vmatprep.subr.mxu0 0.0
        %919 = vmatpush1.msra.mxu0 0.0
        %920 = vmatprep.subr.mxu0 0.0
        %921 = vmatpush1.msra.mxu0 0.0
        %922 = vmatprep.subr.mxu0 0.0
        %923 = vmatpush1.msra.mxu0 0.0
        %924 = vmatprep.subr.mxu0 0.0
        %925 = vmatpush1.msra.mxu0 0.0
        %926 = vmatprep.subr.mxu0 0.0
        %927 = vmatpush1.msra.mxu0 0.0
        %928 = vmatprep.subr.mxu0 0.0
        %929 = vmatpush1.msra.mxu0 0.0
        %930 = vmatprep.subr.mxu0 0.0
        %931 = vmatpush1.msra.mxu0 0.0
        %932 = vmatprep.subr.mxu0 0.0
        %933 = vmatpush1.msra.mxu0 0.0
        %934 = vmatprep.subr.mxu0 0.0
        %935 = vmatpush1.msra.mxu0 0.0
        %936 = vmatprep.subr.mxu0 0.0
        %937 = vmatpush1.msra.mxu0 0.0
        %938 = vmatprep.subr.mxu0 0.0
        %939 = vmatpush1.msra.mxu0 0.0
        %940 = vmatprep.subr.mxu0 0.0
        %941 = vmatpush1.msra.mxu0 0.0
        %942 = vmatprep.subr.mxu0 0.0
        %943 = vmatpush1.msra.mxu0 0.0
        %944 = vmatprep.mubr.f32.mxu0 0.0
        %945 = vmatmul.mubr.f32.gmra.mrb[0].mxu0 %v875
        %v946 = vpop.f32.mrb[0].mxu0
        %v947 = vadd.f32 0.0, %v946
        %v948 = vpop.f32.mrb[0].mxu0
        %949 = vmatprep.mubr.f32.mxu0 0.0
        %950 = vmatmul.mubr.f32.gmra.mrb[0].mxu0 %v878
        %v951 = vpop.f32.mrb[0].mxu0
        %v952 = vadd.f32 0.0, %v951
        %v953 = vpop.f32.mrb[0].mxu0
        %954 = vdwg.mxu0
        %v955 = vsub.f32 %v543, %v947
        %v956 = vmul.f32 %v955, %v952
        %v957 = vld [vmem:[%s10] sm:$0xff]
        %v958 = vld [vmem:[%s10 + $0x8] sm:$0xff]
        %v959 = vld [vmem:[%s10 + $0x10] sm:$0xff]
        %v960 = vld [vmem:[%s10 + $0x18] sm:$0xff]
        %v961 = vld [vmem:[%s10 + $0x20] sm:$0xff]
        %v962 = vld [vmem:[%s10 + $0x28] sm:$0xff]
        %v963 = vld [vmem:[%s10 + $0x30] sm:$0xff]
        %v964 = vld [vmem:[%s10 + $0x38] sm:$0xff]
        %v965 = vld [vmem:[%s10 + $0x40] sm:$0xff]
        %v966 = vld [vmem:[%s10 + $0x48] sm:$0xff]
        %v967 = vld [vmem:[%s10 + $0x50] sm:$0xff]
        %v968 = vld [vmem:[%s10 + $0x58] sm:$0xff]
        %v969 = vld [vmem:[%s10 + $0x60] sm:$0xff]
        %v970 = vld [vmem:[%s10 + $0x68] sm:$0xff]
        %v971 = vld [vmem:[%s10 + $0x70] sm:$0xff]
        %v972 = vld [vmem:[%s10 + $0x78] sm:$0xff]
        %v973 = vld [vmem:[%s11] sm:$0xff]
        %v974 = vld [vmem:[%s11 + $0x8] sm:$0xff]
        %v975 = vld [vmem:[%s11 + $0x10] sm:$0xff]
        %v976 = vld [vmem:[%s11 + $0x18] sm:$0xff]
        %v977 = vld [vmem:[%s12] sm:$0xff]
        %v978 = vld [vmem:[%s12 + $0x8] sm:$0xff]
        %v979 = vld [vmem:[%s12 + $0x10] sm:$0xff]
        %v980 = vld [vmem:[%s12 + $0x18] sm:$0xff]
        %985 = vrot.lane.b32.xlu0 %v973, 32
        %v986 = vpop.permute.xlu0 %985
        %987 = vrot.lane.b32.xlu0 %v974, 32
        %v988 = vpop.permute.xlu0 %987
        %989 = vrot.lane.b32.xlu0 %v975, 32
        %v990 = vpop.permute.xlu0 %989
        %991 = vrot.lane.b32.xlu0 %v976, 32
        %v992 = vpop.permute.xlu0 %991
        %v997 = vmul.f32 %v764, %v986
        %v998 = vmul.f32 %v764, %v988
        %v999 = vmul.f32 %v764, %v990
        %v1000 = vmul.f32 %v764, %v992
        %1001 = vrot.lane.b32.xlu0 %v973, 64
        %v1002 = vpop.permute.xlu0 %1001
        %1003 = vrot.lane.b32.xlu0 %v974, 64
        %v1004 = vpop.permute.xlu0 %1003
        %1005 = vrot.lane.b32.xlu0 %v975, 64
        %v1006 = vpop.permute.xlu0 %1005
        %1007 = vrot.lane.b32.xlu0 %v976, 64
        %v1008 = vpop.permute.xlu0 %1007
        %v1013 = vmul.f32 %v764, %v1002
        %v1014 = vmul.f32 %v764, %v1004
        %v1015 = vmul.f32 %v764, %v1006
        %v1016 = vmul.f32 %v764, %v1008
        %1018 = vrot.lane.b32.xlu0 %v544, 8
        %v1019 = vpop.permute.xlu0 %1018
        %1021 = vrot.lane.b32.xlu0 %v544, 16
        %v1022 = vpop.permute.xlu0 %1021
        %1024 = vrot.lane.b32.xlu0 %v544, 24
        %v1025 = vpop.permute.xlu0 %1024
        %v1027 = vsel %vm873, %v544, %v1019
        %vm1028 = vcmask 130048
        %v1029 = vsel %vm1028, %v1027, %v1022
        %vm1030 = vcmask 195584
        %v1031 = vsel %vm1030, %v1029, %v1025
        %1032 = vmatprep.subr.mxu0 0.0
        %1033 = vmatpush1.msra.mxu0 %v957
        %1034 = vmatprep.subr.mxu0 0.0
        %1035 = vmatpush1.msra.mxu0 %v958
        %1036 = vmatprep.subr.mxu0 0.0
        %1037 = vmatpush1.msra.mxu0 %v959
        %1038 = vmatprep.subr.mxu0 0.0
        %1039 = vmatpush1.msra.mxu0 %v960
        %1040 = vmatprep.subr.mxu0 0.0
        %1041 = vmatpush1.msra.mxu0 %v961
        %1042 = vmatprep.subr.mxu0 0.0
        %1043 = vmatpush1.msra.mxu0 %v962
        %1044 = vmatprep.subr.mxu0 0.0
        %1045 = vmatpush1.msra.mxu0 %v963
        %1046 = vmatprep.subr.mxu0 0.0
        %1047 = vmatpush1.msra.mxu0 %v964
        %1048 = vmatprep.subr.mxu0 0.0
        %1049 = vmatpush1.msra.mxu0 %v965
        %1050 = vmatprep.subr.mxu0 0.0
        %1051 = vmatpush1.msra.mxu0 %v966
        %1052 = vmatprep.subr.mxu0 0.0
        %1053 = vmatpush1.msra.mxu0 %v967
        %1054 = vmatprep.subr.mxu0 0.0
        %1055 = vmatpush1.msra.mxu0 %v968
        %1056 = vmatprep.subr.mxu0 0.0
        %1057 = vmatpush1.msra.mxu0 %v969
        %1058 = vmatprep.subr.mxu0 0.0
        %1059 = vmatpush1.msra.mxu0 %v970
        %1060 = vmatprep.subr.mxu0 0.0
        %1061 = vmatpush1.msra.mxu0 %v971
        %1062 = vmatprep.subr.mxu0 0.0
        %1063 = vmatpush1.msra.mxu0 %v972
        %1064 = vmatprep.subr.mxu0 0.0
        %1065 = vmatpush1.msra.mxu0 0.0
        %1066 = vmatprep.subr.mxu0 0.0
        %1067 = vmatpush1.msra.mxu0 0.0
        %1068 = vmatprep.subr.mxu0 0.0
        %1069 = vmatpush1.msra.mxu0 0.0
        %1070 = vmatprep.subr.mxu0 0.0
        %1071 = vmatpush1.msra.mxu0 0.0
        %1072 = vmatprep.subr.mxu0 0.0
        %1073 = vmatpush1.msra.mxu0 0.0
        %1074 = vmatprep.subr.mxu0 0.0
        %1075 = vmatpush1.msra.mxu0 0.0
        %1076 = vmatprep.subr.mxu0 0.0
        %1077 = vmatpush1.msra.mxu0 0.0
        %1078 = vmatprep.subr.mxu0 0.0
        %1079 = vmatpush1.msra.mxu0 0.0
        %1080 = vmatprep.subr.mxu0 0.0
        %1081 = vmatpush1.msra.mxu0 0.0
        %1082 = vmatprep.subr.mxu0 0.0
        %1083 = vmatpush1.msra.mxu0 0.0
        %1084 = vmatprep.subr.mxu0 0.0
        %1085 = vmatpush1.msra.mxu0 0.0
        %1086 = vmatprep.subr.mxu0 0.0
        %1087 = vmatpush1.msra.mxu0 0.0
        %1088 = vmatprep.subr.mxu0 0.0
        %1089 = vmatpush1.msra.mxu0 0.0
        %1090 = vmatprep.subr.mxu0 0.0
        %1091 = vmatpush1.msra.mxu0 0.0
        %1092 = vmatprep.subr.mxu0 0.0
        %1093 = vmatpush1.msra.mxu0 0.0
        %1094 = vmatprep.subr.mxu0 0.0
        %1095 = vmatpush1.msra.mxu0 0.0
        %1096 = vmatprep.mubr.f32.mxu0 0.0
        %1097 = vmatmul.mubr.f32.gmra.mrb[0].mxu0 %v956
        %v1098 = vpop.f32.mrb[0].mxu0
        %v1099 = vadd.f32 %v1031, %v1098
        %v1100 = vpop.f32.mrb[0].mxu0
        %1101 = vdwg.mxu0
        %1106 = vrot.lane.b32.xlu0 %v997, 96
        %v1107 = vpop.permute.xlu0 %1106
        %1108 = vrot.lane.b32.xlu0 %v998, 96
        %v1109 = vpop.permute.xlu0 %1108
        %1110 = vrot.lane.b32.xlu0 %v999, 96
        %v1111 = vpop.permute.xlu0 %1110
        %1112 = vrot.lane.b32.xlu0 %v1000, 96
        %v1113 = vpop.permute.xlu0 %1112
        %v1115 = vsel %vm545, %v764, 0
        %v1117 = vsel %vm545, %v1107, 0
        %v1119 = vsel %vm545, %v1109, 0
        %v1121 = vsel %vm545, %v1111, 0
        %v1123 = vsel %vm545, %v1113, 0
        %1125 = vmatprep.subr.mxu0 0.0
        %1126 = vmatpush1.xpose.msra.mxu0 %v1117
        %1127 = vmatprep.subr.mxu0 0.0
        %1128 = vmatpush1.xpose.msra.mxu0 %v1119
        %1129 = vmatprep.subr.mxu0 0.0
        %1130 = vmatpush1.xpose.msra.mxu0 %v1121
        %1131 = vmatprep.subr.mxu0 0.0
        %1132 = vmatpush1.xpose.msra.mxu0 %v1123
        %1133 = vmatprep.subr.mxu0 0.0
        %1134 = vmatpush1.xpose.msra.mxu0 0.0
        %1135 = vmatprep.subr.mxu0 0.0
        %1136 = vmatpush1.xpose.msra.mxu0 0.0
        %1137 = vmatprep.subr.mxu0 0.0
        %1138 = vmatpush1.xpose.msra.mxu0 0.0
        %1139 = vmatprep.subr.mxu0 0.0
        %1140 = vmatpush1.xpose.msra.mxu0 0.0
        %1141 = vmatprep.subr.mxu0 0.0
        %1142 = vmatpush1.xpose.msra.mxu0 0.0
        %1143 = vmatprep.subr.mxu0 0.0
        %1144 = vmatpush1.xpose.msra.mxu0 0.0
        %1145 = vmatprep.subr.mxu0 0.0
        %1146 = vmatpush1.xpose.msra.mxu0 0.0
        %1147 = vmatprep.subr.mxu0 0.0
        %1148 = vmatpush1.xpose.msra.mxu0 0.0
        %1149 = vmatprep.subr.mxu0 0.0
        %1150 = vmatpush1.xpose.msra.mxu0 0.0
        %1151 = vmatprep.subr.mxu0 0.0
        %1152 = vmatpush1.xpose.msra.mxu0 0.0
        %1153 = vmatprep.subr.mxu0 0.0
        %1154 = vmatpush1.xpose.msra.mxu0 0.0
        %1155 = vmatprep.subr.mxu0 0.0
        %1156 = vmatpush1.xpose.msra.mxu0 0.0
        %1157 = vmatprep.subr.mxu0 0.0
        %1158 = vmatpush1.xpose.msra.mxu0 0.0
        %1159 = vmatprep.subr.mxu0 0.0
        %1160 = vmatpush1.xpose.msra.mxu0 0.0
        %1161 = vmatprep.subr.mxu0 0.0
        %1162 = vmatpush1.xpose.msra.mxu0 0.0
        %1163 = vmatprep.subr.mxu0 0.0
        %1164 = vmatpush1.xpose.msra.mxu0 0.0
        %1165 = vmatprep.subr.mxu0 0.0
        %1166 = vmatpush1.xpose.msra.mxu0 0.0
        %1167 = vmatprep.subr.mxu0 0.0
        %1168 = vmatpush1.xpose.msra.mxu0 0.0
        %1169 = vmatprep.subr.mxu0 0.0
        %1170 = vmatpush1.xpose.msra.mxu0 0.0
        %1171 = vmatprep.subr.mxu0 0.0
        %1172 = vmatpush1.xpose.msra.mxu0 0.0
        %1173 = vmatprep.subr.mxu0 0.0
        %1174 = vmatpush1.xpose.msra.mxu0 0.0
        %1175 = vmatprep.subr.mxu0 0.0
        %1176 = vmatpush1.xpose.msra.mxu0 0.0
        %1177 = vmatprep.subr.mxu0 0.0
        %1178 = vmatpush1.xpose.msra.mxu0 0.0
        %1179 = vmatprep.subr.mxu0 0.0
        %1180 = vmatpush1.xpose.msra.mxu0 0.0
        %1181 = vmatprep.subr.mxu0 0.0
        %1182 = vmatpush1.xpose.msra.mxu0 0.0
        %1183 = vmatprep.subr.mxu0 0.0
        %1184 = vmatpush1.xpose.msra.mxu0 0.0
        %1185 = vmatprep.subr.mxu0 0.0
        %1186 = vmatpush1.xpose.msra.mxu0 0.0
        %1187 = vmatprep.subr.mxu0 0.0
        %1188 = vmatpush1.xpose.msra.mxu0 0.0
        %1189 = vmatprep.mubr.f32.mxu0 0.0
        %1190 = vmatmul.mubr.f32.gmra.mrb[0].mxu0 %v1115
        %v1191 = vpop.f32.mrb[0].mxu0
        %v1192 = vadd.f32 %v1099, %v1191
        %v1193 = vpop.f32.mrb[0].mxu0
        %1194 = vdwg.mxu0
        %v1195 = vsel %vm545, %v1192, -inf
        %1196 = vmax.xlane.f32.xlu0 %v1195
        %v1197 = vpop.xlane.xlu0 %1196
        %v1198 = vsub.f32 %v1192, %v1197
        %v1199 = vmul.f32 %v1198, 1.442695
        %v1200 = vpow.pop %v1199
        %v1202 = vsel %vm545, %v1200, 0
        %1204 = vmatprep.subr.mxu0 0.0
        %1205 = vmatpush1.msra.mxu0 %v977
        %1206 = vmatprep.subr.mxu0 0.0
        %1207 = vmatpush1.msra.mxu0 %v978
        %1208 = vmatprep.subr.mxu0 0.0
        %1209 = vmatpush1.msra.mxu0 %v979
        %1210 = vmatprep.subr.mxu0 0.0
        %1211 = vmatpush1.msra.mxu0 %v980
        %1212 = vmatprep.subr.mxu0 0.0
        %1213 = vmatpush1.msra.mxu0 0.0
        %1214 = vmatprep.subr.mxu0 0.0
        %1215 = vmatpush1.msra.mxu0 0.0
        %1216 = vmatprep.subr.mxu0 0.0
        %1217 = vmatpush1.msra.mxu0 0.0
        %1218 = vmatprep.subr.mxu0 0.0
        %1219 = vmatpush1.msra.mxu0 0.0
        %1220 = vmatprep.subr.mxu0 0.0
        %1221 = vmatpush1.msra.mxu0 0.0
        %1222 = vmatprep.subr.mxu0 0.0
        %1223 = vmatpush1.msra.mxu0 0.0
        %1224 = vmatprep.subr.mxu0 0.0
        %1225 = vmatpush1.msra.mxu0 0.0
        %1226 = vmatprep.subr.mxu0 0.0
        %1227 = vmatpush1.msra.mxu0 0.0
        %1228 = vmatprep.subr.mxu0 0.0
        %1229 = vmatpush1.msra.mxu0 0.0
        %1230 = vmatprep.subr.mxu0 0.0
        %1231 = vmatpush1.msra.mxu0 0.0
        %1232 = vmatprep.subr.mxu0 0.0
        %1233 = vmatpush1.msra.mxu0 0.0
        %1234 = vmatprep.subr.mxu0 0.0
        %1235 = vmatpush1.msra.mxu0 0.0
        %1236 = vmatprep.subr.mxu0 0.0
        %1237 = vmatpush1.msra.mxu0 0.0
        %1238 = vmatprep.subr.mxu0 0.0
        %1239 = vmatpush1.msra.mxu0 0.0
        %1240 = vmatprep.subr.mxu0 0.0
        %1241 = vmatpush1.msra.mxu0 0.0
        %1242 = vmatprep.subr.mxu0 0.0
        %1243 = vmatpush1.msra.mxu0 0.0
        %1244 = vmatprep.subr.mxu0 0.0
        %1245 = vmatpush1.msra.mxu0 0.0
        %1246 = vmatprep.subr.mxu0 0.0
        %1247 = vmatpush1.msra.mxu0 0.0
        %1248 = vmatprep.subr.mxu0 0.0
        %1249 = vmatpush1.msra.mxu0 0.0
        %1250 = vmatprep.subr.mxu0 0.0
        %1251 = vmatpush1.msra.mxu0 0.0
        %1252 = vmatprep.subr.mxu0 0.0
        %1253 = vmatpush1.msra.mxu0 0.0
        %1254 = vmatprep.subr.mxu0 0.0
        %1255 = vmatpush1.msra.mxu0 0.0
        %1256 = vmatprep.subr.mxu0 0.0
        %1257 = vmatpush1.msra.mxu0 0.0
        %1258 = vmatprep.subr.mxu0 0.0
        %1259 = vmatpush1.msra.mxu0 0.0
        %1260 = vmatprep.subr.mxu0 0.0
        %1261 = vmatpush1.msra.mxu0 0.0
        %1262 = vmatprep.subr.mxu0 0.0
        %1263 = vmatpush1.msra.mxu0 0.0
        %1264 = vmatprep.subr.mxu0 0.0
        %1265 = vmatpush1.msra.mxu0 0.0
        %1266 = vmatprep.subr.mxu0 0.0
        %1267 = vmatpush1.msra.mxu0 0.0
        %1268 = vmatprep.mubr.f32.mxu0 0.0
        %1269 = vmatmul.mubr.f32.gmra.mrb[0].mxu0 %v1202
        %v1270 = vpop.f32.mrb[0].mxu0
        %v1271 = vadd.f32 0.0, %v1270
        %v1272 = vpop.f32.mrb[0].mxu0
        %1273 = vdwg.mxu0
        %v1274 = vrcp.pop %v1271
        %v1275 = vmul.f32 %v1200, %v1274
        %1280 = vrot.lane.b32.xlu0 %v1013, 64
        %v1281 = vpop.permute.xlu0 %1280
        %1282 = vrot.lane.b32.xlu0 %v1014, 64
        %v1283 = vpop.permute.xlu0 %1282
        %1284 = vrot.lane.b32.xlu0 %v1015, 64
        %v1285 = vpop.permute.xlu0 %1284
        %1286 = vrot.lane.b32.xlu0 %v1016, 64
        %v1287 = vpop.permute.xlu0 %1286
        %v1293 = vsel %vm545, %v1275, 0
        %1295 = vmatprep.subr.mxu0 0.0
        %1296 = vmatpush1.msra.mxu0 %v1281
        %1297 = vmatprep.subr.mxu0 0.0
        %1298 = vmatpush1.msra.mxu0 %v1283
        %1299 = vmatprep.subr.mxu0 0.0
        %1300 = vmatpush1.msra.mxu0 %v1285
        %1301 = vmatprep.subr.mxu0 0.0
        %1302 = vmatpush1.msra.mxu0 %v1287
        %1303 = vmatprep.subr.mxu0 0.0
        %1304 = vmatpush1.msra.mxu0 0.0
        %1305 = vmatprep.subr.mxu0 0.0
        %1306 = vmatpush1.msra.mxu0 0.0
        %1307 = vmatprep.subr.mxu0 0.0
        %1308 = vmatpush1.msra.mxu0 0.0
        %1309 = vmatprep.subr.mxu0 0.0
        %1310 = vmatpush1.msra.mxu0 0.0
        %1311 = vmatprep.subr.mxu0 0.0
        %1312 = vmatpush1.msra.mxu0 0.0
        %1313 = vmatprep.subr.mxu0 0.0
        %1314 = vmatpush1.msra.mxu0 0.0
        %1315 = vmatprep.subr.mxu0 0.0
        %1316 = vmatpush1.msra.mxu0 0.0
        %1317 = vmatprep.subr.mxu0 0.0
        %1318 = vmatpush1.msra.mxu0 0.0
        %1319 = vmatprep.subr.mxu0 0.0
        %1320 = vmatpush1.msra.mxu0 0.0
        %1321 = vmatprep.subr.mxu0 0.0
        %1322 = vmatpush1.msra.mxu0 0.0
        %1323 = vmatprep.subr.mxu0 0.0
        %1324 = vmatpush1.msra.mxu0 0.0
        %1325 = vmatprep.subr.mxu0 0.0
        %1326 = vmatpush1.msra.mxu0 0.0
        %1327 = vmatprep.subr.mxu0 0.0
        %1328 = vmatpush1.msra.mxu0 0.0
        %1329 = vmatprep.subr.mxu0 0.0
        %1330 = vmatpush1.msra.mxu0 0.0
        %1331 = vmatprep.subr.mxu0 0.0
        %1332 = vmatpush1.msra.mxu0 0.0
        %1333 = vmatprep.subr.mxu0 0.0
        %1334 = vmatpush1.msra.mxu0 0.0
        %1335 = vmatprep.subr.mxu0 0.0
        %1336 = vmatpush1.msra.mxu0 0.0
        %1337 = vmatprep.subr.mxu0 0.0
        %1338 = vmatpush1.msra.mxu0 0.0
        %1339 = vmatprep.subr.mxu0 0.0
        %1340 = vmatpush1.msra.mxu0 0.0
        %1341 = vmatprep.subr.mxu0 0.0
        %1342 = vmatpush1.msra.mxu0 0.0
        %1343 = vmatprep.subr.mxu0 0.0
        %1344 = vmatpush1.msra.mxu0 0.0
        %1345 = vmatprep.subr.mxu0 0.0
        %1346 = vmatpush1.msra.mxu0 0.0
        %1347 = vmatprep.subr.mxu0 0.0
        %1348 = vmatpush1.msra.mxu0 0.0
        %1349 = vmatprep.subr.mxu0 0.0
        %1350 = vmatpush1.msra.mxu0 0.0
        %1351 = vmatprep.subr.mxu0 0.0
        %1352 = vmatpush1.msra.mxu0 0.0
        %1353 = vmatprep.subr.mxu0 0.0
        %1354 = vmatpush1.msra.mxu0 0.0
        %1355 = vmatprep.subr.mxu0 0.0
        %1356 = vmatpush1.msra.mxu0 0.0
        %1357 = vmatprep.subr.mxu0 0.0
        %1358 = vmatpush1.msra.mxu0 0.0
        %1359 = vmatprep.mubr.f32.mxu0 0.0
        %1360 = vmatmul.mubr.f32.gmra.mrb[0].mxu0 %v1293
        %v1361 = vpop.f32.mrb[0].mxu0
        %v1362 = vadd.f32 0.0, %v1361
        %v1363 = vpop.f32.mrb[0].mxu0
        %1364 = vdwg.mxu0
        %1366 = vrot.lane.b32.xlu0 %v772, 32
        %v1367 = vpop.permute.xlu0 %1366
        %v1369 = vmul.f32 %v1362, %v1367
        %v1370 = vld [vmem:[%s7] sm:$0xff]
        %v1371 = vld [vmem:[%s7 + $0x8] sm:$0xff]
        %v1372 = vld [vmem:[%s7 + $0x10] sm:$0xff]
        %v1373 = vld [vmem:[%s7 + $0x18] sm:$0xff]
        %v1375 = vsel %vm545, %v1369, 0
        %1377 = vmatprep.subr.mxu0 0.0
        %1378 = vmatpush1.msra.mxu0 %v1370
        %1379 = vmatprep.subr.mxu0 0.0
        %1380 = vmatpush1.msra.mxu0 %v1371
        %1381 = vmatprep.subr.mxu0 0.0
        %1382 = vmatpush1.msra.mxu0 %v1372
        %1383 = vmatprep.subr.mxu0 0.0
        %1384 = vmatpush1.msra.mxu0 %v1373
        %1385 = vmatprep.subr.mxu0 0.0
        %1386 = vmatpush1.msra.mxu0 0.0
        %1387 = vmatprep.subr.mxu0 0.0
        %1388 = vmatpush1.msra.mxu0 0.0
        %1389 = vmatprep.subr.mxu0 0.0
        %1390 = vmatpush1.msra.mxu0 0.0
        %1391 = vmatprep.subr.mxu0 0.0
        %1392 = vmatpush1.msra.mxu0 0.0
        %1393 = vmatprep.subr.mxu0 0.0
        %1394 = vmatpush1.msra.mxu0 0.0
        %1395 = vmatprep.subr.mxu0 0.0
        %1396 = vmatpush1.msra.mxu0 0.0
        %1397 = vmatprep.subr.mxu0 0.0
        %1398 = vmatpush1.msra.mxu0 0.0
        %1399 = vmatprep.subr.mxu0 0.0
        %1400 = vmatpush1.msra.mxu0 0.0
        %1401 = vmatprep.subr.mxu0 0.0
        %1402 = vmatpush1.msra.mxu0 0.0
        %1403 = vmatprep.subr.mxu0 0.0
        %1404 = vmatpush1.msra.mxu0 0.0
        %1405 = vmatprep.subr.mxu0 0.0
        %1406 = vmatpush1.msra.mxu0 0.0
        %1407 = vmatprep.subr.mxu0 0.0
        %1408 = vmatpush1.msra.mxu0 0.0
        %1409 = vmatprep.subr.mxu0 0.0
        %1410 = vmatpush1.msra.mxu0 0.0
        %1411 = vmatprep.subr.mxu0 0.0
        %1412 = vmatpush1.msra.mxu0 0.0
        %1413 = vmatprep.subr.mxu0 0.0
        %1414 = vmatpush1.msra.mxu0 0.0
        %1415 = vmatprep.subr.mxu0 0.0
        %1416 = vmatpush1.msra.mxu0 0.0
        %1417 = vmatprep.subr.mxu0 0.0
        %1418 = vmatpush1.msra.mxu0 0.0
        %1419 = vmatprep.subr.mxu0 0.0
        %1420 = vmatpush1.msra.mxu0 0.0
        %1421 = vmatprep.subr.mxu0 0.0
        %1422 = vmatpush1.msra.mxu0 0.0
        %1423 = vmatprep.subr.mxu0 0.0
        %1424 = vmatpush1.msra.mxu0 0.0
        %1425 = vmatprep.subr.mxu0 0.0
        %1426 = vmatpush1.msra.mxu0 0.0
        %1427 = vmatprep.subr.mxu0 0.0
        %1428 = vmatpush1.msra.mxu0 0.0
        %1429 = vmatprep.subr.mxu0 0.0
        %1430 = vmatpush1.msra.mxu0 0.0
        %1431 = vmatprep.subr.mxu0 0.0
        %1432 = vmatpush1.msra.mxu0 0.0
        %1433 = vmatprep.subr.mxu0 0.0
        %1434 = vmatpush1.msra.mxu0 0.0
        %1435 = vmatprep.subr.mxu0 0.0
        %1436 = vmatpush1.msra.mxu0 0.0
        %1437 = vmatprep.subr.mxu0 0.0
        %1438 = vmatpush1.msra.mxu0 0.0
        %1439 = vmatprep.subr.mxu0 0.0
        %1440 = vmatpush1.msra.mxu0 0.0
        %1441 = vmatprep.mubr.f32.mxu0 0.0
        %1442 = vmatmul.mubr.f32.gmra.mrb[0].mxu0 %v1375
        %v1443 = vpop.f32.mrb[0].mxu0
        %v1444 = vadd.f32 0.0, %v1443
        %v1445 = vpop.f32.mrb[0].mxu0
        %1446 = vdwg.mxu0
        %1448 = vrot.lane.b32.xlu0 %v1444, 64
        %v1449 = vpop.permute.xlu0 %1448
        %v1451 = vmul.f32 %v659, %v1449
        %1453 = vrot.lane.b32.xlu0 %v1451, 64
        %v1454 = vpop.permute.xlu0 %1453
        %v1456 = vadd.f32 %v541, %v1454
        %v1457 = vsel %vm545, %v1456, 0.0
        %1458 = vadd.xlane.f32.xlu0 %v1457
        %v1459 = vpop.xlane.xlu0 %1458
        %v1460 = vmul.f32 %v1459, %v549
        %v1461 = vsub.f32 %v1456, %v1460
        %v1462 = vmul.f32 %v1461, %v1461
        %v1463 = vsel %vm545, %v1462, 0.0
        %1464 = vadd.xlane.f32.xlu0 %v1463
        %v1465 = vpop.xlane.xlu0 %1464
        %v1466 = vmul.f32 %v1465, %v549
        %v1467 = vadd.f32 %v1466, 1e-05
        %v1468 = vrsqrt.pop %v1467
        %v1469 = vmul.f32 %v1461, %v1468
        %1471 = vrot.lane.b32.xlu0 %v1469, 96
        %v1472 = vpop.permute.xlu0 %1471
        %v1474 = vmul.f32 %v659, %v1472
        %1476 = vrot.lane.b32.xlu0 %v652, 96
        %v1477 = vpop.permute.xlu0 %1476
        %v1479 = vadd.f32 %v1474, %v1477
        %v1480 = vld [vmem:[%s13] sm:$0xff]
        %v1481 = vld [vmem:[%s13 + $0x8] sm:$0xff]
        %v1482 = vld [vmem:[%s13 + $0x10] sm:$0xff]
        %v1483 = vld [vmem:[%s13 + $0x18] sm:$0xff]
        %1485 = vrot.lane.b32.xlu0 %v1479, 32
        %v1486 = vpop.permute.xlu0 %1485
        %v1487 = vsel %vm545, %v1486, 0
        %1489 = vmatprep.subr.mxu0 0.0
        %1490 = vmatpush1.msra.mxu0 %v1480
        %1491 = vmatprep.subr.mxu0 0.0
        %1492 = vmatpush1.msra.mxu0 %v1481
        %1493 = vmatprep.subr.mxu0 0.0
        %1494 = vmatpush1.msra.mxu0 %v1482
        %1495 = vmatprep.subr.mxu0 0.0
        %1496 = vmatpush1.msra.mxu0 %v1483
        %1497 = vmatprep.subr.mxu0 0.0
        %1498 = vmatpush1.msra.mxu0 0.0
        %1499 = vmatprep.subr.mxu0 0.0
        %1500 = vmatpush1.msra.mxu0 0.0
        %1501 = vmatprep.subr.mxu0 0.0
        %1502 = vmatpush1.msra.mxu0 0.0
        %1503 = vmatprep.subr.mxu0 0.0
        %1504 = vmatpush1.msra.mxu0 0.0
        %1505 = vmatprep.subr.mxu0 0.0
        %1506 = vmatpush1.msra.mxu0 0.0
        %1507 = vmatprep.subr.mxu0 0.0
        %1508 = vmatpush1.msra.mxu0 0.0
        %1509 = vmatprep.subr.mxu0 0.0
        %1510 = vmatpush1.msra.mxu0 0.0
        %1511 = vmatprep.subr.mxu0 0.0
        %1512 = vmatpush1.msra.mxu0 0.0
        %1513 = vmatprep.subr.mxu0 0.0
        %1514 = vmatpush1.msra.mxu0 0.0
        %1515 = vmatprep.subr.mxu0 0.0
        %1516 = vmatpush1.msra.mxu0 0.0
        %1517 = vmatprep.subr.mxu0 0.0
        %1518 = vmatpush1.msra.mxu0 0.0
        %1519 = vmatprep.subr.mxu0 0.0
        %1520 = vmatpush1.msra.mxu0 0.0
        %1521 = vmatprep.subr.mxu0 0.0
        %1522 = vmatpush1.msra.mxu0 0.0
        %1523 = vmatprep.subr.mxu0 0.0
        %1524 = vmatpush1.msra.mxu0 0.0
        %1525 = vmatprep.subr.mxu0 0.0
        %1526 = vmatpush1.msra.mxu0 0.0
        %1527 = vmatprep.subr.mxu0 0.0
        %1528 = vmatpush1.msra.mxu0 0.0
        %1529 = vmatprep.subr.mxu0 0.0
        %1530 = vmatpush1.msra.mxu0 0.0
        %1531 = vmatprep.subr.mxu0 0.0
        %1532 = vmatpush1.msra.mxu0 0.0
        %1533 = vmatprep.subr.mxu0 0.0
        %1534 = vmatpush1.msra.mxu0 0.0
        %1535 = vmatprep.subr.mxu0 0.0
        %1536 = vmatpush1.msra.mxu0 0.0
        %1537 = vmatprep.subr.mxu0 0.0
        %1538 = vmatpush1.msra.mxu0 0.0
        %1539 = vmatprep.subr.mxu0 0.0
        %1540 = vmatpush1.msra.mxu0 0.0
        %1541 = vmatprep.subr.mxu0 0.0
        %1542 = vmatpush1.msra.mxu0 0.0
        %1543 = vmatprep.subr.mxu0 0.0
        %1544 = vmatpush1.msra.mxu0 0.0
        %1545 = vmatprep.subr.mxu0 0.0
        %1546 = vmatpush1.msra.mxu0 0.0
        %1547 = vmatprep.subr.mxu0 0.0
        %1548 = vmatpush1.msra.mxu0 0.0
        %1549 = vmatprep.subr.mxu0 0.0
        %1550 = vmatpush1.msra.mxu0 0.0
        %1551 = vmatprep.subr.mxu0 0.0
        %1552 = vmatpush1.msra.mxu0 0.0
        %1553 = vmatprep.mubr.f32.mxu0 0.0
        %1554 = vmatmul.mubr.f32.gmra.mrb[0].mxu0 %v1487
        %v1555 = vpop.f32.mrb[0].mxu0
        %v1556 = vadd.f32 0.0, %v1555
        %v1557 = vpop.f32.mrb[0].mxu0
        %1558 = vdwg.mxu0
        %v1559 = vxor.u32 %v1556, 2147483648
        %v1560 = vmul.f32 %v1559, 1.442695
        %v1561 = vpow.pop %v1560
        %v1562 = vadd.f32 %v1561, 1.0
        %v1563 = vrcp.pop %v1562
        %v1564 = vmul.f32 1.0, %v1563
        %v1565 = vmul.f32 %v1556, %v1564
        %1567 = vrot.lane.b32.xlu0 %v1556, 64
        %v1568 = vpop.permute.xlu0 %1567
        %v1570 = vmul.f32 %v1565, %v1568
        %v1571 = vld [vmem:[%s14] sm:$0xff]
        %v1572 = vld [vmem:[%s14 + $0x8] sm:$0xff]
        %v1573 = vld [vmem:[%s14 + $0x10] sm:$0xff]
        %v1574 = vld [vmem:[%s14 + $0x18] sm:$0xff]
        %v1575 = vld [vmem:[%s14 + $0x20] sm:$0xff]
        %v1576 = vld [vmem:[%s14 + $0x28] sm:$0xff]
        %v1577 = vld [vmem:[%s14 + $0x30] sm:$0xff]
        %v1578 = vld [vmem:[%s14 + $0x38] sm:$0xff]
        %vm1579 = vcmask 523264
        %v1581 = vsel %vm1579, %v1570, 0
        %1583 = vmatprep.subr.mxu0 0.0
        %1584 = vmatpush1.msra.mxu0 %v1571
        %1585 = vmatprep.subr.mxu0 0.0
        %1586 = vmatpush1.msra.mxu0 %v1572
        %1587 = vmatprep.subr.mxu0 0.0
        %1588 = vmatpush1.msra.mxu0 %v1573
        %1589 = vmatprep.subr.mxu0 0.0
        %1590 = vmatpush1.msra.mxu0 %v1574
        %1591 = vmatprep.subr.mxu0 0.0
        %1592 = vmatpush1.msra.mxu0 %v1575
        %1593 = vmatprep.subr.mxu0 0.0
        %1594 = vmatpush1.msra.mxu0 %v1576
        %1595 = vmatprep.subr.mxu0 0.0
        %1596 = vmatpush1.msra.mxu0 %v1577
        %1597 = vmatprep.subr.mxu0 0.0
        %1598 = vmatpush1.msra.mxu0 %v1578
        %1599 = vmatprep.subr.mxu0 0.0
        %1600 = vmatpush1.msra.mxu0 0.0
        %1601 = vmatprep.subr.mxu0 0.0
        %1602 = vmatpush1.msra.mxu0 0.0
        %1603 = vmatprep.subr.mxu0 0.0
        %1604 = vmatpush1.msra.mxu0 0.0
        %1605 = vmatprep.subr.mxu0 0.0
        %1606 = vmatpush1.msra.mxu0 0.0
        %1607 = vmatprep.subr.mxu0 0.0
        %1608 = vmatpush1.msra.mxu0 0.0
        %1609 = vmatprep.subr.mxu0 0.0
        %1610 = vmatpush1.msra.mxu0 0.0
        %1611 = vmatprep.subr.mxu0 0.0
        %1612 = vmatpush1.msra.mxu0 0.0
        %1613 = vmatprep.subr.mxu0 0.0
        %1614 = vmatpush1.msra.mxu0 0.0
        %1615 = vmatprep.subr.mxu0 0.0
        %1616 = vmatpush1.msra.mxu0 0.0
        %1617 = vmatprep.subr.mxu0 0.0
        %1618 = vmatpush1.msra.mxu0 0.0
        %1619 = vmatprep.subr.mxu0 0.0
        %1620 = vmatpush1.msra.mxu0 0.0
        %1621 = vmatprep.subr.mxu0 0.0
        %1622 = vmatpush1.msra.mxu0 0.0
        %1623 = vmatprep.subr.mxu0 0.0
        %1624 = vmatpush1.msra.mxu0 0.0
        %1625 = vmatprep.subr.mxu0 0.0
        %1626 = vmatpush1.msra.mxu0 0.0
        %1627 = vmatprep.subr.mxu0 0.0
        %1628 = vmatpush1.msra.mxu0 0.0
        %1629 = vmatprep.subr.mxu0 0.0
        %1630 = vmatpush1.msra.mxu0 0.0
        %1631 = vmatprep.subr.mxu0 0.0
        %1632 = vmatpush1.msra.mxu0 0.0
        %1633 = vmatprep.subr.mxu0 0.0
        %1634 = vmatpush1.msra.mxu0 0.0
        %1635 = vmatprep.subr.mxu0 0.0
        %1636 = vmatpush1.msra.mxu0 0.0
        %1637 = vmatprep.subr.mxu0 0.0
        %1638 = vmatpush1.msra.mxu0 0.0
        %1639 = vmatprep.subr.mxu0 0.0
        %1640 = vmatpush1.msra.mxu0 0.0
        %1641 = vmatprep.subr.mxu0 0.0
        %1642 = vmatpush1.msra.mxu0 0.0
        %1643 = vmatprep.subr.mxu0 0.0
        %1644 = vmatpush1.msra.mxu0 0.0
        %1645 = vmatprep.subr.mxu0 0.0
        %1646 = vmatpush1.msra.mxu0 0.0
        %1647 = vmatprep.mubr.f32.mxu0 0.0
        %1648 = vmatmul.mubr.f32.gmra.mrb[0].mxu0 %v1581
        %v1649 = vpop.f32.mrb[0].mxu0
        %v1650 = vadd.f32 0.0, %v1649
        %v1651 = vpop.f32.mrb[0].mxu0
        %1652 = vdwg.mxu0
        %1654 = vrot.lane.b32.xlu0 %v1650, 32
        %v1655 = vpop.permute.xlu0 %1654
        %v1657 = vmul.f32 %v665, %v1655
        %1659 = vrot.lane.b32.xlu0 %v1657, 96
        %v1660 = vpop.permute.xlu0 %1659
        %v1662 = vadd.f32 %v1456, %v1660
        %1663 = vst.msk [vmem:[%s524] sm:$0xff] %vm545, %v1662
        %s1664 = sand.u32 %s372, 1
        %s1665 = scalar_lea.sflag [#allocation3], %s1664
        %s1666 = sand.u32 %s372, 1
        %s1667 = smul.addr %s1666, 8
        %s1668 = scalar_lea.vmem [#allocation2], %s1667
        // Predicated region
        $region81: #{tpu_custom_call.1} parent=79 // pred_check
          %p1669 = pneg %p382
        $region82: #{tpu_custom_call.1} parent=79 // pred_check_branch
          %1671 = sbr.rel (%p1669) target = $region84
        $region83: #{tpu_custom_call.1} parent=79 // pred_region
          %s1673 = ssub.s32 128, 128
          %1674 = vsyncadd %s1665, %s1673
          %s1675 = smul.addr %s29, 128
          %s1676 = scalar_lea.hbm %s15, %s1675
          %s1678 = sshll.u32 %s1668, 4
          %s1679 = int_to_ptr.vmem [resolvable:$true] %s1678
          %1681 = dma.vmem_to_hbm [thread:$0]  %s1679, 128, %s1676, %s1665
        $region84: #{tpu_custom_call.1} parent=79 // pred_fallthru
          _
      $region80: #{tpu_custom_call.1} parent=5 // pred_fallthru
        _
      %p1682 = scmp.le.s32.totalorder 2, %s24
      // Predicated region
      $region85: #{tpu_custom_call.1} parent=5 // pred_check
        %p1683 = pneg %p1682
      $region86: #{tpu_custom_call.1} parent=5 // pred_check_branch
        %1685 = sbr.rel (%p1683) target = $region88
      $region87: #{tpu_custom_call.1} parent=5 // pred_region
        %s1686 = ssub.s32 %s24, 2
        // Predicated region
        $region89: #{tpu_custom_call.1} parent=87 // pred_check
          %p1687 = pneg %p388
        $region90: #{tpu_custom_call.1} parent=87 // pred_check_branch
          %1689 = sbr.rel (%p1687) target = $region92
        $region91: #{tpu_custom_call.1} parent=87 // pred_region
          %s1690 = sand.u32 %s373, 1
          %s1691 = scalar_lea.sflag [#allocation3], %s1690
          %s1692 = sand.u32 %s373, 1
          %s1693 = smul.addr %s1692, 8
          %s1694 = scalar_lea.vmem [#allocation2], %s1693
          %1695 = dma.done %s1691, 128
        $region92: #{tpu_custom_call.1} parent=87 // pred_fallthru
          _
      $region88: #{tpu_custom_call.1} parent=5 // pred_fallthru
        _
    $region6: #{tpu_custom_call.1} parent=1 // loop_footer
      %s28 = sadd.s32 1, %s24
    $region7: #{tpu_custom_call.1} parent=1 // loop_footer_branch
      %23 = sbr.rel target = $region3
    $region8: #{tpu_custom_call.1} parent=1 // loop_exit
      _
    %1696 = vsyncpa [#allocation3], 1
    %s1697 = scalar_lea.sflag [#allocation3], 1
    %1698 = vsyncpa %s1697, 1

</llo_original>
